<compile_context>
chip_gen: v7x
topology: tpu7x:2x2x1
jax: 0.10.0
libtpu: 0.0.40
codegen_flags: <defaults>
</compile_context>

<pallas_src>
import functools

import jax
import jax.numpy as jnp
from jax import lax
from jax.experimental import pallas as pl
from jax.experimental.pallas import tpu as pltpu

INPUT_SIZE = 27
HIDDEN = 128
OUT_LANES = 128  # lane-dense (padded) output width; logical output is 27


def _sigmoid_via_tanh(x):
    # sigmoid(x) = 0.5 * tanh(0.5 * x) + 0.5  -> single EUP push per vreg.
    return 0.5 * jnp.tanh(0.5 * x) + 0.5


def _lstm_kernel(x_ref, wih_ref, whh_ref, b_ref, wfc_ref, bfc_ref,  # inputs
                 out_ref,                                           # output
                 gx_sc, hs_sc,                                      # scratch
                 *, T, Bp):
    H = HIDDEN

    # ---- Prologue: hoisted input projection for all timesteps (one GEMM) ----
    # (T*Bp, I)bf16 @ (I, 4H)bf16 -> f32, + (1, 4H)f32
    gx_sc[...] = (jnp.dot(x_ref[...], wih_ref[...],
                          preferred_element_type=jnp.float32)
                  + b_ref[...])

    # Hold the recurrent weight resident (bf16, 128x512 = 32 vregs) so it is
    # not re-streamed from VMEM on every unrolled step.
    whh = whh_ref[...]                                        # (H, 4H) bf16

    # ---- Serial recurrence over time; h/c live in vregs via the carry ----
    def step(t, carry):
        h_prev, c_prev = carry                                # (Bp, H) f32 each
        row = pl.multiple_of(t * Bp, Bp)                      # sublane-aligned

        gates = gx_sc[pl.ds(row, Bp), :] + jnp.dot(
            h_prev.astype(jnp.bfloat16), whh,
            preferred_element_type=jnp.float32)               # (Bp, 4H) f32

        # PyTorch gate order [i, f, g, o]; slices are 128-lane aligned.
        i_g = _sigmoid_via_tanh(gates[:, 0 * H:1 * H])
        f_g = _sigmoid_via_tanh(gates[:, 1 * H:2 * H])
        g_g = jnp.tanh(gates[:, 2 * H:3 * H])
        o_g = _sigmoid_via_tanh(gates[:, 3 * H:4 * H])

        c_new = f_g * c_prev + i_g * g_g
        h_new = o_g * jnp.tanh(c_new)

        hs_sc[pl.ds(row, Bp), :] = h_new                      # f32, lane-dense
        return (h_new, c_new)

    h0 = jnp.zeros((Bp, H), jnp.float32)
    c0 = jnp.zeros((Bp, H), jnp.float32)
    lax.fori_loop(0, T, step, (h0, c0), unroll=True)

    # ---- Epilogue: single fc projection over the whole hidden slab ----
    # bf16 cast of the slab happens once here (off the critical serial path).
    out_ref[...] = (jnp.dot(hs_sc[...].astype(jnp.bfloat16), wfc_ref[...],
                            preferred_element_type=jnp.float32)
                    + bfc_ref[...]).astype(out_ref.dtype)


@jax.jit
def name_lstm_forward(x, w_ih, w_hh, b_ih, b_hh, fc_w, fc_b):
    """x: (B, T, 27) float32; returns (B, T, 27) float32 (PyTorch semantics)."""
    B, T, I = x.shape
    H = HIDDEN
    Bp = 8 * ((B + 7) // 8)                    # pad batch to sublane granule

    # Pre-transpose weights so the kernel does plain (M,K)@(K,N) matmuls.
    # Matmul operands are bf16 (MXU-native); biases stay f32.
    wih_t = jnp.asarray(w_ih, jnp.float32).T.astype(jnp.bfloat16)   # (I, 4H)
    whh_t = jnp.asarray(w_hh, jnp.float32).T.astype(jnp.bfloat16)   # (H, 4H)
    b = (jnp.asarray(b_ih, jnp.float32)
         + jnp.asarray(b_hh, jnp.float32)).reshape(1, 4 * H)        # (1, 4H)
    # Lane-dense fc: pad the 27 output columns to 128 with zeros.
    wfc_t = jnp.asarray(fc_w, jnp.float32).T                        # (H, 27)
    wfc_t = jnp.pad(wfc_t, ((0, 0), (0, OUT_LANES - I))).astype(jnp.bfloat16)
    bfc = jnp.pad(jnp.asarray(fc_b, jnp.float32),
                  (0, OUT_LANES - I)).reshape(1, OUT_LANES)         # (1, 128)

    # batch_first (B,T,I) -> time-major (T,B,I) -> pad batch -> flatten rows.
    x_tm = jnp.transpose(x, (1, 0, 2)).astype(jnp.float32)    # (T, B, I)
    x_tm = jnp.pad(x_tm, ((0, 0), (0, Bp - B), (0, 0)))       # (T, Bp, I)
    x_flat = x_tm.reshape(T * Bp, I).astype(jnp.bfloat16)     # (T*Bp, I)

    out_flat = pl.pallas_call(
        functools.partial(_lstm_kernel, T=T, Bp=Bp),
        out_shape=jax.ShapeDtypeStruct((T * Bp, OUT_LANES), jnp.float32),
        in_specs=[
            pl.BlockSpec(memory_space=pltpu.MemorySpace.VMEM),  # x_flat (bf16)
            pl.BlockSpec(memory_space=pltpu.MemorySpace.VMEM),  # W_ih^T (bf16)
            pl.BlockSpec(memory_space=pltpu.MemorySpace.VMEM),  # W_hh^T (bf16)
            pl.BlockSpec(memory_space=pltpu.MemorySpace.VMEM),  # b_ih+b_hh (f32)
            pl.BlockSpec(memory_space=pltpu.MemorySpace.VMEM),  # fc W^T padded (bf16)
            pl.BlockSpec(memory_space=pltpu.MemorySpace.VMEM),  # fc b padded (f32)
        ],
        out_specs=pl.BlockSpec(memory_space=pltpu.MemorySpace.VMEM),
        scratch_shapes=[
            pltpu.VMEM((T * Bp, 4 * H), jnp.float32),   # hoisted gates_x
            pltpu.VMEM((T * Bp, H), jnp.float32),       # hidden-state slab
        ],
    )(x_flat, wih_t, whh_t, b, wfc_t, bfc)

    # (T*Bp, 128) -> (T, Bp, 128) -> drop padded batch rows / lanes -> (B, T, 27)
    out_tm = out_flat.reshape(T, Bp, OUT_LANES)[:, :B, :I]
    return jnp.transpose(out_tm, (1, 0, 2))


def _reference_forward(x, w_ih, w_hh, b_ih, b_hh, fc_w, fc_b):
    """Pure-JAX f32 reference matching torch.nn.LSTM + Linear semantics."""
    B, T, I = x.shape
    H = HIDDEN
    h = jnp.zeros((B, H), jnp.float32)
    c = jnp.zeros((B, H), jnp.float32)

    def step(carry, x_t):
        h, c = carry
        gates = x_t @ w_ih.T + b_ih + h @ w_hh.T + b_hh
        i_g = jax.nn.sigmoid(gates[:, 0 * H:1 * H])
        f_g = jax.nn.sigmoid(gates[:, 1 * H:2 * H])
        g_g = jnp.tanh(gates[:, 2 * H:3 * H])
        o_g = jax.nn.sigmoid(gates[:, 3 * H:4 * H])
        c = f_g * c + i_g * g_g
        h = o_g * jnp.tanh(c)
        return (h, c), h

    (_, _), hs = jax.lax.scan(step, (h, c), jnp.transpose(x, (1, 0, 2)))
    out = hs @ fc_w.T + fc_b                       # (T, B, 27)
    return jnp.transpose(out, (1, 0, 2))


if __name__ == "__main__":
    key = jax.random.PRNGKey(0)
    B, T, I, H = 2, 8, INPUT_SIZE, HIDDEN

    ks = jax.random.split(key, 8)
    bound = 1.0 / jnp.sqrt(H)
    # Deterministic parameter init (mimics PyTorch U(-1/sqrt(H), 1/sqrt(H))).
    w_ih = jax.random.uniform(ks[0], (4 * H, I), jnp.float32, -bound, bound)
    w_hh = jax.random.uniform(ks[1], (4 * H, H), jnp.float32, -bound, bound)
    b_ih = jax.random.uniform(ks[2], (4 * H,), jnp.float32, -bound, bound)
    b_hh = jax.random.uniform(ks[3], (4 * H,), jnp.float32, -bound, bound)
    fc_w = jax.random.uniform(ks[4], (I, H), jnp.float32, -bound, bound)
    fc_b = jax.random.uniform(ks[5], (I,), jnp.float32, -bound, bound)

    x = jax.random.normal(ks[6], (B, T, I), jnp.float32)

    out = name_lstm_forward(x, w_ih, w_hh, b_ih, b_hh, fc_w, fc_b)
    out = jax.block_until_ready(out)

    ref = _reference_forward(x, w_ih, w_hh, b_ih, b_hh, fc_w, fc_b)
    assert out.shape == (B, T, I)
    # Tolerance relaxed vs f32 reference because matmul operands are bf16
    # (f32 accumulation); typical error at this size is ~1e-2 absolute.
    max_diff = float(jnp.max(jnp.abs(out - ref)))
    assert jnp.allclose(out, ref, atol=5e-2, rtol=5e-2), (
        f"mismatch vs JAX reference, max abs diff = {max_diff}")

    print("KERNEL_OK")
</pallas_src>

<mosaic_0001>
module attributes {stable_mosaic.version = 11 : i64} {
  func.func @_lstm_kernel(%arg0: memref<64x27xbf16, #tpu.memory_space<vmem>>, %arg1: memref<27x512xbf16, #tpu.memory_space<vmem>>, %arg2: memref<128x512xbf16, #tpu.memory_space<vmem>>, %arg3: memref<1x512xf32, #tpu.memory_space<vmem>>, %arg4: memref<128x128xbf16, #tpu.memory_space<vmem>>, %arg5: memref<1x128xf32, #tpu.memory_space<vmem>>, %arg6: memref<64x128xf32, #tpu.memory_space<vmem>>, %arg7: memref<64x512xf32, #tpu.memory_space<vmem>>, %arg8: memref<64x128xf32, #tpu.memory_space<vmem>>) attributes {dimension_semantics = [], scalar_prefetch = 0 : i64, scratch_operands = 2 : i64, tpu.core_type = #tpu.core_type<tc>} {
    %c0 = arith.constant 0 : index
    %c0_0 = arith.constant 0 : index
    %0 = vector.load %arg0[%c0, %c0_0] : memref<64x27xbf16, #tpu.memory_space<vmem>>, vector<64x27xbf16>
    %c0_1 = arith.constant 0 : index
    %c0_2 = arith.constant 0 : index
    %1 = vector.load %arg1[%c0_1, %c0_2] : memref<27x512xbf16, #tpu.memory_space<vmem>>, vector<27x512xbf16>
    %cst = arith.constant dense<0.000000e+00> : vector<64x512xf32>
    %2 = tpu.matmul %0, %1, %cst {dimension_numbers = #tpu.dot_dimension_numbers<[1], [0], [0], [1], [0, 0, 1, 1], [], []>} : vector<64x27xbf16>, vector<27x512xbf16>, vector<64x512xf32> -> vector<64x512xf32>
    %c0_3 = arith.constant 0 : index
    %c0_4 = arith.constant 0 : index
    %3 = vector.load %arg3[%c0_3, %c0_4] : memref<1x512xf32, #tpu.memory_space<vmem>>, vector<1x512xf32>
    %4 = vector.broadcast %3 : vector<1x512xf32> to vector<64x512xf32>
    %5 = arith.addf %2, %4 : vector<64x512xf32>
    %c0_5 = arith.constant 0 : index
    %c0_6 = arith.constant 0 : index
    %6 = vector.load %arg7[%c0_5, %c0_6] : memref<64x512xf32, #tpu.memory_space<vmem>>, vector<64x512xf32>
    tpu.vector_store %arg7[%c0_5, %c0_6], %5 {strides = array<i32>} : memref<64x512xf32, #tpu.memory_space<vmem>>, vector<64x512xf32>,
    %c0_7 = arith.constant 0 : index
    %c0_8 = arith.constant 0 : index
    %7 = vector.load %arg2[%c0_7, %c0_8] : memref<128x512xbf16, #tpu.memory_space<vmem>>, vector<128x512xbf16>
    %cst_9 = arith.constant 0.000000e+00 : f32
    %8 = vector.broadcast %cst_9 : f32 to vector<8x128xf32>
    %cst_10 = arith.constant 0.000000e+00 : f32
    %9 = vector.broadcast %cst_10 : f32 to vector<8x128xf32>
    %c0_i32 = arith.constant 0 : i32
    %c8_i32 = arith.constant 8 : i32
    %10 = arith.muli %c0_i32, %c8_i32 : i32
    %11 = tpu.assume_multiple %10, 8 : i32
    %12 = arith.index_cast %11 : i32 to index
    %c0_11 = arith.constant 0 : index
    %13 = vector.load %arg7[%12, %c0_11] : memref<64x512xf32, #tpu.memory_space<vmem>>, vector<8x512xf32>
    %14 = arith.truncf %8 : vector<8x128xf32> to vector<8x128xbf16>
    %cst_12 = arith.constant dense<0.000000e+00> : vector<8x512xf32>
    %15 = tpu.matmul %14, %7, %cst_12 {dimension_numbers = #tpu.dot_dimension_numbers<[1], [0], [0], [1], [0, 0, 1, 1], [], []>} : vector<8x128xbf16>, vector<128x512xbf16>, vector<8x512xf32> -> vector<8x512xf32>
    %16 = arith.addf %13, %15 : vector<8x512xf32>
    %17 = vector.extract_strided_slice %16 {offsets = [0, 0], sizes = [8, 128], strides = [1, 1]} : vector<8x512xf32> to vector<8x128xf32>
    %cst_13 = arith.constant 5.000000e-01 : f32
    %18 = vector.broadcast %cst_13 : f32 to vector<8x128xf32>
    %19 = arith.mulf %18, %17 : vector<8x128xf32>
    %20 = math.tanh %19 : vector<8x128xf32>
    %cst_14 = arith.constant 5.000000e-01 : f32
    %21 = vector.broadcast %cst_14 : f32 to vector<8x128xf32>
    %22 = arith.mulf %21, %20 : vector<8x128xf32>
    %cst_15 = arith.constant 5.000000e-01 : f32
    %23 = vector.broadcast %cst_15 : f32 to vector<8x128xf32>
    %24 = arith.addf %22, %23 : vector<8x128xf32>
    %25 = vector.extract_strided_slice %16 {offsets = [0, 128], sizes = [8, 128], strides = [1, 1]} : vector<8x512xf32> to vector<8x128xf32>
    %cst_16 = arith.constant 5.000000e-01 : f32
    %26 = vector.broadcast %cst_16 : f32 to vector<8x128xf32>
    %27 = arith.mulf %26, %25 : vector<8x128xf32>
    %28 = math.tanh %27 : vector<8x128xf32>
    %cst_17 = arith.constant 5.000000e-01 : f32
    %29 = vector.broadcast %cst_17 : f32 to vector<8x128xf32>
    %30 = arith.mulf %29, %28 : vector<8x128xf32>
    %cst_18 = arith.constant 5.000000e-01 : f32
    %31 = vector.broadcast %cst_18 : f32 to vector<8x128xf32>
    %32 = arith.addf %30, %31 : vector<8x128xf32>
    %33 = vector.extract_strided_slice %16 {offsets = [0, 256], sizes = [8, 128], strides = [1, 1]} : vector<8x512xf32> to vector<8x128xf32>
    %34 = math.tanh %33 : vector<8x128xf32>
    %35 = vector.extract_strided_slice %16 {offsets = [0, 384], sizes = [8, 128], strides = [1, 1]} : vector<8x512xf32> to vector<8x128xf32>
    %cst_19 = arith.constant 5.000000e-01 : f32
    %36 = vector.broadcast %cst_19 : f32 to vector<8x128xf32>
    %37 = arith.mulf %36, %35 : vector<8x128xf32>
    %38 = math.tanh %37 : vector<8x128xf32>
    %cst_20 = arith.constant 5.000000e-01 : f32
    %39 = vector.broadcast %cst_20 : f32 to vector<8x128xf32>
    %40 = arith.mulf %39, %38 : vector<8x128xf32>
    %cst_21 = arith.constant 5.000000e-01 : f32
    %41 = vector.broadcast %cst_21 : f32 to vector<8x128xf32>
    %42 = arith.addf %40, %41 : vector<8x128xf32>
    %43 = arith.mulf %32, %9 : vector<8x128xf32>
    %44 = arith.mulf %24, %34 : vector<8x128xf32>
    %45 = arith.addf %43, %44 : vector<8x128xf32>
    %46 = math.tanh %45 : vector<8x128xf32>
    %47 = arith.mulf %42, %46 : vector<8x128xf32>
    %48 = arith.index_cast %11 : i32 to index
    %c0_22 = arith.constant 0 : index
    %49 = vector.load %arg8[%48, %c0_22] : memref<64x128xf32, #tpu.memory_space<vmem>>, vector<8x128xf32>
    tpu.vector_store %arg8[%48, %c0_22], %47 {strides = array<i32>} : memref<64x128xf32, #tpu.memory_space<vmem>>, vector<8x128xf32>,
    %c1_i32 = arith.constant 1 : i32
    %c8_i32_23 = arith.constant 8 : i32
    %50 = arith.muli %c1_i32, %c8_i32_23 : i32
    %51 = tpu.assume_multiple %50, 8 : i32
    %52 = arith.index_cast %51 : i32 to index
    %c0_24 = arith.constant 0 : index
    %53 = vector.load %arg7[%52, %c0_24] : memref<64x512xf32, #tpu.memory_space<vmem>>, vector<8x512xf32>
    %54 = arith.truncf %47 : vector<8x128xf32> to vector<8x128xbf16>
    %cst_25 = arith.constant dense<0.000000e+00> : vector<8x512xf32>
    %55 = tpu.matmul %54, %7, %cst_25 {dimension_numbers = #tpu.dot_dimension_numbers<[1], [0], [0], [1], [0, 0, 1, 1], [], []>} : vector<8x128xbf16>, vector<128x512xbf16>, vector<8x512xf32> -> vector<8x512xf32>
    %56 = arith.addf %53, %55 : vector<8x512xf32>
    %57 = vector.extract_strided_slice %56 {offsets = [0, 0], sizes = [8, 128], strides = [1, 1]} : vector<8x512xf32> to vector<8x128xf32>
    %cst_26 = arith.constant 5.000000e-01 : f32
    %58 = vector.broadcast %cst_26 : f32 to vector<8x128xf32>
    %59 = arith.mulf %58, %57 : vector<8x128xf32>
    %60 = math.tanh %59 : vector<8x128xf32>
    %cst_27 = arith.constant 5.000000e-01 : f32
    %61 = vector.broadcast %cst_27 : f32 to vector<8x128xf32>
    %62 = arith.mulf %61, %60 : vector<8x128xf32>
    %cst_28 = arith.constant 5.000000e-01 : f32
    %63 = vector.broadcast %cst_28 : f32 to vector<8x128xf32>
    %64 = arith.addf %62, %63 : vector<8x128xf32>
    %65 = vector.extract_strided_slice %56 {offsets = [0, 128], sizes = [8, 128], strides = [1, 1]} : vector<8x512xf32> to vector<8x128xf32>
    %cst_29 = arith.constant 5.000000e-01 : f32
    %66 = vector.broadcast %cst_29 : f32 to vector<8x128xf32>
    %67 = arith.mulf %66, %65 : vector<8x128xf32>
    %68 = math.tanh %67 : vector<8x128xf32>
    %cst_30 = arith.constant 5.000000e-01 : f32
    %69 = vector.broadcast %cst_30 : f32 to vector<8x128xf32>
    %70 = arith.mulf %69, %68 : vector<8x128xf32>
    %cst_31 = arith.constant 5.000000e-01 : f32
    %71 = vector.broadcast %cst_31 : f32 to vector<8x128xf32>
    %72 = arith.addf %70, %71 : vector<8x128xf32>
    %73 = vector.extract_strided_slice %56 {offsets = [0, 256], sizes = [8, 128], strides = [1, 1]} : vector<8x512xf32> to vector<8x128xf32>
    %74 = math.tanh %73 : vector<8x128xf32>
    %75 = vector.extract_strided_slice %56 {offsets = [0, 384], sizes = [8, 128], strides = [1, 1]} : vector<8x512xf32> to vector<8x128xf32>
    %cst_32 = arith.constant 5.000000e-01 : f32
    %76 = vector.broadcast %cst_32 : f32 to vector<8x128xf32>
    %77 = arith.mulf %76, %75 : vector<8x128xf32>
    %78 = math.tanh %77 : vector<8x128xf32>
    %cst_33 = arith.constant 5.000000e-01 : f32
    %79 = vector.broadcast %cst_33 : f32 to vector<8x128xf32>
    %80 = arith.mulf %79, %78 : vector<8x128xf32>
    %cst_34 = arith.constant 5.000000e-01 : f32
    %81 = vector.broadcast %cst_34 : f32 to vector<8x128xf32>
    %82 = arith.addf %80, %81 : vector<8x128xf32>
    %83 = arith.mulf %72, %45 : vector<8x128xf32>
    %84 = arith.mulf %64, %74 : vector<8x128xf32>
    %85 = arith.addf %83, %84 : vector<8x128xf32>
    %86 = math.tanh %85 : vector<8x128xf32>
    %87 = arith.mulf %82, %86 : vector<8x128xf32>
    %88 = arith.index_cast %51 : i32 to index
    %c0_35 = arith.constant 0 : index
    %89 = vector.load %arg8[%88, %c0_35] : memref<64x128xf32, #tpu.memory_space<vmem>>, vector<8x128xf32>
    tpu.vector_store %arg8[%88, %c0_35], %87 {strides = array<i32>} : memref<64x128xf32, #tpu.memory_space<vmem>>, vector<8x128xf32>,
    %c2_i32 = arith.constant 2 : i32
    %c8_i32_36 = arith.constant 8 : i32
    %90 = arith.muli %c2_i32, %c8_i32_36 : i32
    %91 = tpu.assume_multiple %90, 8 : i32
    %92 = arith.index_cast %91 : i32 to index
    %c0_37 = arith.constant 0 : index
    %93 = vector.load %arg7[%92, %c0_37] : memref<64x512xf32, #tpu.memory_space<vmem>>, vector<8x512xf32>
    %94 = arith.truncf %87 : vector<8x128xf32> to vector<8x128xbf16>
    %cst_38 = arith.constant dense<0.000000e+00> : vector<8x512xf32>
    %95 = tpu.matmul %94, %7, %cst_38 {dimension_numbers = #tpu.dot_dimension_numbers<[1], [0], [0], [1], [0, 0, 1, 1], [], []>} : vector<8x128xbf16>, vector<128x512xbf16>, vector<8x512xf32> -> vector<8x512xf32>
    %96 = arith.addf %93, %95 : vector<8x512xf32>
    %97 = vector.extract_strided_slice %96 {offsets = [0, 0], sizes = [8, 128], strides = [1, 1]} : vector<8x512xf32> to vector<8x128xf32>
    %cst_39 = arith.constant 5.000000e-01 : f32
    %98 = vector.broadcast %cst_39 : f32 to vector<8x128xf32>
    %99 = arith.mulf %98, %97 : vector<8x128xf32>
    %100 = math.tanh %99 : vector<8x128xf32>
    %cst_40 = arith.constant 5.000000e-01 : f32
    %101 = vector.broadcast %cst_40 : f32 to vector<8x128xf32>
    %102 = arith.mulf %101, %100 : vector<8x128xf32>
    %cst_41 = arith.constant 5.000000e-01 : f32
    %103 = vector.broadcast %cst_41 : f32 to vector<8x128xf32>
    %104 = arith.addf %102, %103 : vector<8x128xf32>
    %105 = vector.extract_strided_slice %96 {offsets = [0, 128], sizes = [8, 128], strides = [1, 1]} : vector<8x512xf32> to vector<8x128xf32>
    %cst_42 = arith.constant 5.000000e-01 : f32
    %106 = vector.broadcast %cst_42 : f32 to vector<8x128xf32>
    %107 = arith.mulf %106, %105 : vector<8x128xf32>
    %108 = math.tanh %107 : vector<8x128xf32>
    %cst_43 = arith.constant 5.000000e-01 : f32
    %109 = vector.broadcast %cst_43 : f32 to vector<8x128xf32>
    %110 = arith.mulf %109, %108 : vector<8x128xf32>
    %cst_44 = arith.constant 5.000000e-01 : f32
    %111 = vector.broadcast %cst_44 : f32 to vector<8x128xf32>
    %112 = arith.addf %110, %111 : vector<8x128xf32>
    %113 = vector.extract_strided_slice %96 {offsets = [0, 256], sizes = [8, 128], strides = [1, 1]} : vector<8x512xf32> to vector<8x128xf32>
    %114 = math.tanh %113 : vector<8x128xf32>
    %115 = vector.extract_strided_slice %96 {offsets = [0, 384], sizes = [8, 128], strides = [1, 1]} : vector<8x512xf32> to vector<8x128xf32>
    %cst_45 = arith.constant 5.000000e-01 : f32
    %116 = vector.broadcast %cst_45 : f32 to vector<8x128xf32>
    %117 = arith.mulf %116, %115 : vector<8x128xf32>
    %118 = math.tanh %117 : vector<8x128xf32>
    %cst_46 = arith.constant 5.000000e-01 : f32
    %119 = vector.broadcast %cst_46 : f32 to vector<8x128xf32>
    %120 = arith.mulf %119, %118 : vector<8x128xf32>
    %cst_47 = arith.constant 5.000000e-01 : f32
    %121 = vector.broadcast %cst_47 : f32 to vector<8x128xf32>
    %122 = arith.addf %120, %121 : vector<8x128xf32>
    %123 = arith.mulf %112, %85 : vector<8x128xf32>
    %124 = arith.mulf %104, %114 : vector<8x128xf32>
    %125 = arith.addf %123, %124 : vector<8x128xf32>
    %126 = math.tanh %125 : vector<8x128xf32>
    %127 = arith.mulf %122, %126 : vector<8x128xf32>
    %128 = arith.index_cast %91 : i32 to index
    %c0_48 = arith.constant 0 : index
    %129 = vector.load %arg8[%128, %c0_48] : memref<64x128xf32, #tpu.memory_space<vmem>>, vector<8x128xf32>
    tpu.vector_store %arg8[%128, %c0_48], %127 {strides = array<i32>} : memref<64x128xf32, #tpu.memory_space<vmem>>, vector<8x128xf32>,
    %c3_i32 = arith.constant 3 : i32
    %c8_i32_49 = arith.constant 8 : i32
    %130 = arith.muli %c3_i32, %c8_i32_49 : i32
    %131 = tpu.assume_multiple %130, 8 : i32
    %132 = arith.index_cast %131 : i32 to index
    %c0_50 = arith.constant 0 : index
    %133 = vector.load %arg7[%132, %c0_50] : memref<64x512xf32, #tpu.memory_space<vmem>>, vector<8x512xf32>
    %134 = arith.truncf %127 : vector<8x128xf32> to vector<8x128xbf16>
    %cst_51 = arith.constant dense<0.000000e+00> : vector<8x512xf32>
    %135 = tpu.matmul %134, %7, %cst_51 {dimension_numbers = #tpu.dot_dimension_numbers<[1], [0], [0], [1], [0, 0, 1, 1], [], []>} : vector<8x128xbf16>, vector<128x512xbf16>, vector<8x512xf32> -> vector<8x512xf32>
    %136 = arith.addf %133, %135 : vector<8x512xf32>
    %137 = vector.extract_strided_slice %136 {offsets = [0, 0], sizes = [8, 128], strides = [1, 1]} : vector<8x512xf32> to vector<8x128xf32>
    %cst_52 = arith.constant 5.000000e-01 : f32
    %138 = vector.broadcast %cst_52 : f32 to vector<8x128xf32>
    %139 = arith.mulf %138, %137 : vector<8x128xf32>
    %140 = math.tanh %139 : vector<8x128xf32>
    %cst_53 = arith.constant 5.000000e-01 : f32
    %141 = vector.broadcast %cst_53 : f32 to vector<8x128xf32>
    %142 = arith.mulf %141, %140 : vector<8x128xf32>
    %cst_54 = arith.constant 5.000000e-01 : f32
    %143 = vector.broadcast %cst_54 : f32 to vector<8x128xf32>
    %144 = arith.addf %142, %143 : vector<8x128xf32>
    %145 = vector.extract_strided_slice %136 {offsets = [0, 128], sizes = [8, 128], strides = [1, 1]} : vector<8x512xf32> to vector<8x128xf32>
    %cst_55 = arith.constant 5.000000e-01 : f32
    %146 = vector.broadcast %cst_55 : f32 to vector<8x128xf32>
    %147 = arith.mulf %146, %145 : vector<8x128xf32>
    %148 = math.tanh %147 : vector<8x128xf32>
    %cst_56 = arith.constant 5.000000e-01 : f32
    %149 = vector.broadcast %cst_56 : f32 to vector<8x128xf32>
    %150 = arith.mulf %149, %148 : vector<8x128xf32>
    %cst_57 = arith.constant 5.000000e-01 : f32
    %151 = vector.broadcast %cst_57 : f32 to vector<8x128xf32>
    %152 = arith.addf %150, %151 : vector<8x128xf32>
    %153 = vector.extract_strided_slice %136 {offsets = [0, 256], sizes = [8, 128], strides = [1, 1]} : vector<8x512xf32> to vector<8x128xf32>
    %154 = math.tanh %153 : vector<8x128xf32>
    %155 = vector.extract_strided_slice %136 {offsets = [0, 384], sizes = [8, 128], strides = [1, 1]} : vector<8x512xf32> to vector<8x128xf32>
    %cst_58 = arith.constant 5.000000e-01 : f32
    %156 = vector.broadcast %cst_58 : f32 to vector<8x128xf32>
    %157 = arith.mulf %156, %155 : vector<8x128xf32>
    %158 = math.tanh %157 : vector<8x128xf32>
    %cst_59 = arith.constant 5.000000e-01 : f32
    %159 = vector.broadcast %cst_59 : f32 to vector<8x128xf32>
    %160 = arith.mulf %159, %158 : vector<8x128xf32>
    %cst_60 = arith.constant 5.000000e-01 : f32
    %161 = vector.broadcast %cst_60 : f32 to vector<8x128xf32>
    %162 = arith.addf %160, %161 : vector<8x128xf32>
    %163 = arith.mulf %152, %125 : vector<8x128xf32>
    %164 = arith.mulf %144, %154 : vector<8x128xf32>
    %165 = arith.addf %163, %164 : vector<8x128xf32>
    %166 = math.tanh %165 : vector<8x128xf32>
    %167 = arith.mulf %162, %166 : vector<8x128xf32>
    %168 = arith.index_cast %131 : i32 to index
    %c0_61 = arith.constant 0 : index
    %169 = vector.load %arg8[%168, %c0_61] : memref<64x128xf32, #tpu.memory_space<vmem>>, vector<8x128xf32>
    tpu.vector_store %arg8[%168, %c0_61], %167 {strides = array<i32>} : memref<64x128xf32, #tpu.memory_space<vmem>>, vector<8x128xf32>,
    %c4_i32 = arith.constant 4 : i32
    %c8_i32_62 = arith.constant 8 : i32
    %170 = arith.muli %c4_i32, %c8_i32_62 : i32
    %171 = tpu.assume_multiple %170, 8 : i32
    %172 = arith.index_cast %171 : i32 to index
    %c0_63 = arith.constant 0 : index
    %173 = vector.load %arg7[%172, %c0_63] : memref<64x512xf32, #tpu.memory_space<vmem>>, vector<8x512xf32>
    %174 = arith.truncf %167 : vector<8x128xf32> to vector<8x128xbf16>
    %cst_64 = arith.constant dense<0.000000e+00> : vector<8x512xf32>
    %175 = tpu.matmul %174, %7, %cst_64 {dimension_numbers = #tpu.dot_dimension_numbers<[1], [0], [0], [1], [0, 0, 1, 1], [], []>} : vector<8x128xbf16>, vector<128x512xbf16>, vector<8x512xf32> -> vector<8x512xf32>
    %176 = arith.addf %173, %175 : vector<8x512xf32>
    %177 = vector.extract_strided_slice %176 {offsets = [0, 0], sizes = [8, 128], strides = [1, 1]} : vector<8x512xf32> to vector<8x128xf32>
    %cst_65 = arith.constant 5.000000e-01 : f32
    %178 = vector.broadcast %cst_65 : f32 to vector<8x128xf32>
    %179 = arith.mulf %178, %177 : vector<8x128xf32>
    %180 = math.tanh %179 : vector<8x128xf32>
    %cst_66 = arith.constant 5.000000e-01 : f32
    %181 = vector.broadcast %cst_66 : f32 to vector<8x128xf32>
    %182 = arith.mulf %181, %180 : vector<8x128xf32>
    %cst_67 = arith.constant 5.000000e-01 : f32
    %183 = vector.broadcast %cst_67 : f32 to vector<8x128xf32>
    %184 = arith.addf %182, %183 : vector<8x128xf32>
    %185 = vector.extract_strided_slice %176 {offsets = [0, 128], sizes = [8, 128], strides = [1, 1]} : vector<8x512xf32> to vector<8x128xf32>
    %cst_68 = arith.constant 5.000000e-01 : f32
    %186 = vector.broadcast %cst_68 : f32 to vector<8x128xf32>
    %187 = arith.mulf %186, %185 : vector<8x128xf32>
    %188 = math.tanh %187 : vector<8x128xf32>
    %cst_69 = arith.constant 5.000000e-01 : f32
    %189 = vector.broadcast %cst_69 : f32 to vector<8x128xf32>
    %190 = arith.mulf %189, %188 : vector<8x128xf32>
    %cst_70 = arith.constant 5.000000e-01 : f32
    %191 = vector.broadcast %cst_70 : f32 to vector<8x128xf32>
    %192 = arith.addf %190, %191 : vector<8x128xf32>
    %193 = vector.extract_strided_slice %176 {offsets = [0, 256], sizes = [8, 128], strides = [1, 1]} : vector<8x512xf32> to vector<8x128xf32>
    %194 = math.tanh %193 : vector<8x128xf32>
    %195 = vector.extract_strided_slice %176 {offsets = [0, 384], sizes = [8, 128], strides = [1, 1]} : vector<8x512xf32> to vector<8x128xf32>
    %cst_71 = arith.constant 5.000000e-01 : f32
    %196 = vector.broadcast %cst_71 : f32 to vector<8x128xf32>
    %197 = arith.mulf %196, %195 : vector<8x128xf32>
    %198 = math.tanh %197 : vector<8x128xf32>
    %cst_72 = arith.constant 5.000000e-01 : f32
    %199 = vector.broadcast %cst_72 : f32 to vector<8x128xf32>
    %200 = arith.mulf %199, %198 : vector<8x128xf32>
    %cst_73 = arith.constant 5.000000e-01 : f32
    %201 = vector.broadcast %cst_73 : f32 to vector<8x128xf32>
    %202 = arith.addf %200, %201 : vector<8x128xf32>
    %203 = arith.mulf %192, %165 : vector<8x128xf32>
    %204 = arith.mulf %184, %194 : vector<8x128xf32>
    %205 = arith.addf %203, %204 : vector<8x128xf32>
    %206 = math.tanh %205 : vector<8x128xf32>
    %207 = arith.mulf %202, %206 : vector<8x128xf32>
    %208 = arith.index_cast %171 : i32 to index
    %c0_74 = arith.constant 0 : index
    %209 = vector.load %arg8[%208, %c0_74] : memref<64x128xf32, #tpu.memory_space<vmem>>, vector<8x128xf32>
    tpu.vector_store %arg8[%208, %c0_74], %207 {strides = array<i32>} : memref<64x128xf32, #tpu.memory_space<vmem>>, vector<8x128xf32>,
    %c5_i32 = arith.constant 5 : i32
    %c8_i32_75 = arith.constant 8 : i32
    %210 = arith.muli %c5_i32, %c8_i32_75 : i32
    %211 = tpu.assume_multiple %210, 8 : i32
    %212 = arith.index_cast %211 : i32 to index
    %c0_76 = arith.constant 0 : index
    %213 = vector.load %arg7[%212, %c0_76] : memref<64x512xf32, #tpu.memory_space<vmem>>, vector<8x512xf32>
    %214 = arith.truncf %207 : vector<8x128xf32> to vector<8x128xbf16>
    %cst_77 = arith.constant dense<0.000000e+00> : vector<8x512xf32>
    %215 = tpu.matmul %214, %7, %cst_77 {dimension_numbers = #tpu.dot_dimension_numbers<[1], [0], [0], [1], [0, 0, 1, 1], [], []>} : vector<8x128xbf16>, vector<128x512xbf16>, vector<8x512xf32> -> vector<8x512xf32>
    %216 = arith.addf %213, %215 : vector<8x512xf32>
    %217 = vector.extract_strided_slice %216 {offsets = [0, 0], sizes = [8, 128], strides = [1, 1]} : vector<8x512xf32> to vector<8x128xf32>
    %cst_78 = arith.constant 5.000000e-01 : f32
    %218 = vector.broadcast %cst_78 : f32 to vector<8x128xf32>
    %219 = arith.mulf %218, %217 : vector<8x128xf32>
    %220 = math.tanh %219 : vector<8x128xf32>
    %cst_79 = arith.constant 5.000000e-01 : f32
    %221 = vector.broadcast %cst_79 : f32 to vector<8x128xf32>
    %222 = arith.mulf %221, %220 : vector<8x128xf32>
    %cst_80 = arith.constant 5.000000e-01 : f32
    %223 = vector.broadcast %cst_80 : f32 to vector<8x128xf32>
    %224 = arith.addf %222, %223 : vector<8x128xf32>
    %225 = vector.extract_strided_slice %216 {offsets = [0, 128], sizes = [8, 128], strides = [1, 1]} : vector<8x512xf32> to vector<8x128xf32>
    %cst_81 = arith.constant 5.000000e-01 : f32
    %226 = vector.broadcast %cst_81 : f32 to vector<8x128xf32>
    %227 = arith.mulf %226, %225 : vector<8x128xf32>
    %228 = math.tanh %227 : vector<8x128xf32>
    %cst_82 = arith.constant 5.000000e-01 : f32
    %229 = vector.broadcast %cst_82 : f32 to vector<8x128xf32>
    %230 = arith.mulf %229, %228 : vector<8x128xf32>
    %cst_83 = arith.constant 5.000000e-01 : f32
    %231 = vector.broadcast %cst_83 : f32 to vector<8x128xf32>
    %232 = arith.addf %230, %231 : vector<8x128xf32>
    %233 = vector.extract_strided_slice %216 {offsets = [0, 256], sizes = [8, 128], strides = [1, 1]} : vector<8x512xf32> to vector<8x128xf32>
    %234 = math.tanh %233 : vector<8x128xf32>
    %235 = vector.extract_strided_slice %216 {offsets = [0, 384], sizes = [8, 128], strides = [1, 1]} : vector<8x512xf32> to vector<8x128xf32>
    %cst_84 = arith.constant 5.000000e-01 : f32
    %236 = vector.broadcast %cst_84 : f32 to vector<8x128xf32>
    %237 = arith.mulf %236, %235 : vector<8x128xf32>
    %238 = math.tanh %237 : vector<8x128xf32>
    %cst_85 = arith.constant 5.000000e-01 : f32
    %239 = vector.broadcast %cst_85 : f32 to vector<8x128xf32>
    %240 = arith.mulf %239, %238 : vector<8x128xf32>
    %cst_86 = arith.constant 5.000000e-01 : f32
    %241 = vector.broadcast %cst_86 : f32 to vector<8x128xf32>
    %242 = arith.addf %240, %241 : vector<8x128xf32>
    %243 = arith.mulf %232, %205 : vector<8x128xf32>
    %244 = arith.mulf %224, %234 : vector<8x128xf32>
    %245 = arith.addf %243, %244 : vector<8x128xf32>
    %246 = math.tanh %245 : vector<8x128xf32>
    %247 = arith.mulf %242, %246 : vector<8x128xf32>
    %248 = arith.index_cast %211 : i32 to index
    %c0_87 = arith.constant 0 : index
    %249 = vector.load %arg8[%248, %c0_87] : memref<64x128xf32, #tpu.memory_space<vmem>>, vector<8x128xf32>
    tpu.vector_store %arg8[%248, %c0_87], %247 {strides = array<i32>} : memref<64x128xf32, #tpu.memory_space<vmem>>, vector<8x128xf32>,
    %c6_i32 = arith.constant 6 : i32
    %c8_i32_88 = arith.constant 8 : i32
    %250 = arith.muli %c6_i32, %c8_i32_88 : i32
    %251 = tpu.assume_multiple %250, 8 : i32
    %252 = arith.index_cast %251 : i32 to index
    %c0_89 = arith.constant 0 : index
    %253 = vector.load %arg7[%252, %c0_89] : memref<64x512xf32, #tpu.memory_space<vmem>>, vector<8x512xf32>
    %254 = arith.truncf %247 : vector<8x128xf32> to vector<8x128xbf16>
    %cst_90 = arith.constant dense<0.000000e+00> : vector<8x512xf32>
    %255 = tpu.matmul %254, %7, %cst_90 {dimension_numbers = #tpu.dot_dimension_numbers<[1], [0], [0], [1], [0, 0, 1, 1], [], []>} : vector<8x128xbf16>, vector<128x512xbf16>, vector<8x512xf32> -> vector<8x512xf32>
    %256 = arith.addf %253, %255 : vector<8x512xf32>
    %257 = vector.extract_strided_slice %256 {offsets = [0, 0], sizes = [8, 128], strides = [1, 1]} : vector<8x512xf32> to vector<8x128xf32>
    %cst_91 = arith.constant 5.000000e-01 : f32
    %258 = vector.broadcast %cst_91 : f32 to vector<8x128xf32>
    %259 = arith.mulf %258, %257 : vector<8x128xf32>
    %260 = math.tanh %259 : vector<8x128xf32>
    %cst_92 = arith.constant 5.000000e-01 : f32
    %261 = vector.broadcast %cst_92 : f32 to vector<8x128xf32>
    %262 = arith.mulf %261, %260 : vector<8x128xf32>
    %cst_93 = arith.constant 5.000000e-01 : f32
    %263 = vector.broadcast %cst_93 : f32 to vector<8x128xf32>
    %264 = arith.addf %262, %263 : vector<8x128xf32>
    %265 = vector.extract_strided_slice %256 {offsets = [0, 128], sizes = [8, 128], strides = [1, 1]} : vector<8x512xf32> to vector<8x128xf32>
    %cst_94 = arith.constant 5.000000e-01 : f32
    %266 = vector.broadcast %cst_94 : f32 to vector<8x128xf32>
    %267 = arith.mulf %266, %265 : vector<8x128xf32>
    %268 = math.tanh %267 : vector<8x128xf32>
    %cst_95 = arith.constant 5.000000e-01 : f32
    %269 = vector.broadcast %cst_95 : f32 to vector<8x128xf32>
    %270 = arith.mulf %269, %268 : vector<8x128xf32>
    %cst_96 = arith.constant 5.000000e-01 : f32
    %271 = vector.broadcast %cst_96 : f32 to vector<8x128xf32>
    %272 = arith.addf %270, %271 : vector<8x128xf32>
    %273 = vector.extract_strided_slice %256 {offsets = [0, 256], sizes = [8, 128], strides = [1, 1]} : vector<8x512xf32> to vector<8x128xf32>
    %274 = math.tanh %273 : vector<8x128xf32>
    %275 = vector.extract_strided_slice %256 {offsets = [0, 384], sizes = [8, 128], strides = [1, 1]} : vector<8x512xf32> to vector<8x128xf32>
    %cst_97 = arith.constant 5.000000e-01 : f32
    %276 = vector.broadcast %cst_97 : f32 to vector<8x128xf32>
    %277 = arith.mulf %276, %275 : vector<8x128xf32>
    %278 = math.tanh %277 : vector<8x128xf32>
    %cst_98 = arith.constant 5.000000e-01 : f32
    %279 = vector.broadcast %cst_98 : f32 to vector<8x128xf32>
    %280 = arith.mulf %279, %278 : vector<8x128xf32>
    %cst_99 = arith.constant 5.000000e-01 : f32
    %281 = vector.broadcast %cst_99 : f32 to vector<8x128xf32>
    %282 = arith.addf %280, %281 : vector<8x128xf32>
    %283 = arith.mulf %272, %245 : vector<8x128xf32>
    %284 = arith.mulf %264, %274 : vector<8x128xf32>
    %285 = arith.addf %283, %284 : vector<8x128xf32>
    %286 = math.tanh %285 : vector<8x128xf32>
    %287 = arith.mulf %282, %286 : vector<8x128xf32>
    %288 = arith.index_cast %251 : i32 to index
    %c0_100 = arith.constant 0 : index
    %289 = vector.load %arg8[%288, %c0_100] : memref<64x128xf32, #tpu.memory_space<vmem>>, vector<8x128xf32>
    tpu.vector_store %arg8[%288, %c0_100], %287 {strides = array<i32>} : memref<64x128xf32, #tpu.memory_space<vmem>>, vector<8x128xf32>,
    %c7_i32 = arith.constant 7 : i32
    %c8_i32_101 = arith.constant 8 : i32
    %290 = arith.muli %c7_i32, %c8_i32_101 : i32
    %291 = tpu.assume_multiple %290, 8 : i32
    %292 = arith.index_cast %291 : i32 to index
    %c0_102 = arith.constant 0 : index
    %293 = vector.load %arg7[%292, %c0_102] : memref<64x512xf32, #tpu.memory_space<vmem>>, vector<8x512xf32>
    %294 = arith.truncf %287 : vector<8x128xf32> to vector<8x128xbf16>
    %cst_103 = arith.constant dense<0.000000e+00> : vector<8x512xf32>
    %295 = tpu.matmul %294, %7, %cst_103 {dimension_numbers = #tpu.dot_dimension_numbers<[1], [0], [0], [1], [0, 0, 1, 1], [], []>} : vector<8x128xbf16>, vector<128x512xbf16>, vector<8x512xf32> -> vector<8x512xf32>
    %296 = arith.addf %293, %295 : vector<8x512xf32>
    %297 = vector.extract_strided_slice %296 {offsets = [0, 0], sizes = [8, 128], strides = [1, 1]} : vector<8x512xf32> to vector<8x128xf32>
    %cst_104 = arith.constant 5.000000e-01 : f32
    %298 = vector.broadcast %cst_104 : f32 to vector<8x128xf32>
    %299 = arith.mulf %298, %297 : vector<8x128xf32>
    %300 = math.tanh %299 : vector<8x128xf32>
    %cst_105 = arith.constant 5.000000e-01 : f32
    %301 = vector.broadcast %cst_105 : f32 to vector<8x128xf32>
    %302 = arith.mulf %301, %300 : vector<8x128xf32>
    %cst_106 = arith.constant 5.000000e-01 : f32
    %303 = vector.broadcast %cst_106 : f32 to vector<8x128xf32>
    %304 = arith.addf %302, %303 : vector<8x128xf32>
    %305 = vector.extract_strided_slice %296 {offsets = [0, 128], sizes = [8, 128], strides = [1, 1]} : vector<8x512xf32> to vector<8x128xf32>
    %cst_107 = arith.constant 5.000000e-01 : f32
    %306 = vector.broadcast %cst_107 : f32 to vector<8x128xf32>
    %307 = arith.mulf %306, %305 : vector<8x128xf32>
    %308 = math.tanh %307 : vector<8x128xf32>
    %cst_108 = arith.constant 5.000000e-01 : f32
    %309 = vector.broadcast %cst_108 : f32 to vector<8x128xf32>
    %310 = arith.mulf %309, %308 : vector<8x128xf32>
    %cst_109 = arith.constant 5.000000e-01 : f32
    %311 = vector.broadcast %cst_109 : f32 to vector<8x128xf32>
    %312 = arith.addf %310, %311 : vector<8x128xf32>
    %313 = vector.extract_strided_slice %296 {offsets = [0, 256], sizes = [8, 128], strides = [1, 1]} : vector<8x512xf32> to vector<8x128xf32>
    %314 = math.tanh %313 : vector<8x128xf32>
    %315 = vector.extract_strided_slice %296 {offsets = [0, 384], sizes = [8, 128], strides = [1, 1]} : vector<8x512xf32> to vector<8x128xf32>
    %cst_110 = arith.constant 5.000000e-01 : f32
    %316 = vector.broadcast %cst_110 : f32 to vector<8x128xf32>
    %317 = arith.mulf %316, %315 : vector<8x128xf32>
    %318 = math.tanh %317 : vector<8x128xf32>
    %cst_111 = arith.constant 5.000000e-01 : f32
    %319 = vector.broadcast %cst_111 : f32 to vector<8x128xf32>
    %320 = arith.mulf %319, %318 : vector<8x128xf32>
    %cst_112 = arith.constant 5.000000e-01 : f32
    %321 = vector.broadcast %cst_112 : f32 to vector<8x128xf32>
    %322 = arith.addf %320, %321 : vector<8x128xf32>
    %323 = arith.mulf %312, %285 : vector<8x128xf32>
    %324 = arith.mulf %304, %314 : vector<8x128xf32>
    %325 = arith.addf %323, %324 : vector<8x128xf32>
    %326 = math.tanh %325 : vector<8x128xf32>
    %327 = arith.mulf %322, %326 : vector<8x128xf32>
    %328 = arith.index_cast %291 : i32 to index
    %c0_113 = arith.constant 0 : index
    %329 = vector.load %arg8[%328, %c0_113] : memref<64x128xf32, #tpu.memory_space<vmem>>, vector<8x128xf32>
    tpu.vector_store %arg8[%328, %c0_113], %327 {strides = array<i32>} : memref<64x128xf32, #tpu.memory_space<vmem>>, vector<8x128xf32>,
    %c8_i32_114 = arith.constant 8 : i32
    %c0_115 = arith.constant 0 : index
    %c0_116 = arith.constant 0 : index
    %330 = vector.load %arg8[%c0_115, %c0_116] : memref<64x128xf32, #tpu.memory_space<vmem>>, vector<64x128xf32>
    %331 = arith.truncf %330 : vector<64x128xf32> to vector<64x128xbf16>
    %c0_117 = arith.constant 0 : index
    %c0_118 = arith.constant 0 : index
    %332 = vector.load %arg4[%c0_117, %c0_118] : memref<128x128xbf16, #tpu.memory_space<vmem>>, vector<128x128xbf16>
    %cst_119 = arith.constant dense<0.000000e+00> : vector<64x128xf32>
    %333 = tpu.matmul %331, %332, %cst_119 {dimension_numbers = #tpu.dot_dimension_numbers<[1], [0], [0], [1], [0, 0, 1, 1], [], []>} : vector<64x128xbf16>, vector<128x128xbf16>, vector<64x128xf32> -> vector<64x128xf32>
    %c0_120 = arith.constant 0 : index
    %c0_121 = arith.constant 0 : index
    %334 = vector.load %arg5[%c0_120, %c0_121] : memref<1x128xf32, #tpu.memory_space<vmem>>, vector<1x128xf32>
    %335 = vector.broadcast %334 : vector<1x128xf32> to vector<64x128xf32>
    %336 = arith.addf %333, %335 : vector<64x128xf32>
    %c0_122 = arith.constant 0 : index
    %c0_123 = arith.constant 0 : index
    %337 = vector.load %arg6[%c0_122, %c0_123] : memref<64x128xf32, #tpu.memory_space<vmem>>, vector<64x128xf32>
    tpu.vector_store %arg6[%c0_122, %c0_123], %336 {strides = array<i32>} : memref<64x128xf32, #tpu.memory_space<vmem>>, vector<64x128xf32>,
    return
  }
}

</mosaic_0001>

<llo_original>
// kernel: name_lstm_forward.1
$region0: #{name_lstm_forward.1}
  #allocation0 [shape = 'u32[]', space=smem, size = 0x4, offset = 0x4, fixed_abs, tag = 'smem constant byte address 0x4 - core index']
  #allocation1 [shape = 'u32[144,128]{1,0:T(1,128)}', space=vmem, size = 0x12000, scoped, tag = 'internal scratch']
  #allocation2 [shape = 'f32[64,512]{1,0:T(8,128)}', space=vmem, size = 0x20000, scoped, tag = 'scratch operand']
  #allocation3 [shape = 'f32[64,128]{1,0:T(8,128)}', space=vmem, size = 0x8000, scoped, tag = 'scratch operand']
  %s0 = inlined_call_operand.vmem [shape: bf16[64,27], index: 0, kind: input, shape index: {}]
  %s1 = inlined_call_operand.vmem [shape: bf16[27,512], index: 1, kind: input, shape index: {}]
  %s2 = inlined_call_operand.vmem [shape: bf16[128,512], index: 2, kind: input, shape index: {}]
  %s3 = inlined_call_operand.vmem [shape: f32[1,512], index: 3, kind: input, shape index: {}]
  %s4 = inlined_call_operand.vmem [shape: bf16[128,128], index: 4, kind: input, shape index: {}]
  %s5 = inlined_call_operand.vmem [shape: f32[1,128], index: 5, kind: input, shape index: {}]
  %s6 = inlined_call_operand.vmem [shape: f32[64,128], index: 6, kind: output, shape index: {}]
  %s7 = sld [smem:[#allocation0]]
  $region34: #{name_lstm_forward.1} parent=0
    _
  %s9 = ssub.s32 1, %s7
  %s10 = scalar_select 0, %s9, %s7
  // Predicated region
  $region2: #{name_lstm_forward.1} parent=0 // pred_check
    _
  $region3: #{name_lstm_forward.1} parent=0 // pred_check_branch
    %12 = sbr.rel (0) target = $region5
  $region4: #{name_lstm_forward.1} parent=0 // pred_region
    _
  $region5: #{name_lstm_forward.1} parent=0 // pred_fallthru
    _
  // Predicated region
  $region6: #{name_lstm_forward.1} parent=0 // pred_check
    _
  $region7: #{name_lstm_forward.1} parent=0 // pred_check_branch
    %14 = sbr.rel (0) target = $region9
  $region8: #{name_lstm_forward.1} parent=0 // pred_region
    _
  $region9: #{name_lstm_forward.1} parent=0 // pred_fallthru
    _
  // Predicated region
  $region10: #{name_lstm_forward.1} parent=0 // pred_check
    _
  $region11: #{name_lstm_forward.1} parent=0 // pred_check_branch
    %16 = sbr.rel (0) target = $region13
  $region12: #{name_lstm_forward.1} parent=0 // pred_region
    _
  $region13: #{name_lstm_forward.1} parent=0 // pred_fallthru
    _
  // Predicated region
  $region14: #{name_lstm_forward.1} parent=0 // pred_check
    _
  $region15: #{name_lstm_forward.1} parent=0 // pred_check_branch
    %18 = sbr.rel (0) target = $region17
  $region16: #{name_lstm_forward.1} parent=0 // pred_region
    _
  $region17: #{name_lstm_forward.1} parent=0 // pred_fallthru
    _
  // Predicated region
  $region18: #{name_lstm_forward.1} parent=0 // pred_check
    _
  $region19: #{name_lstm_forward.1} parent=0 // pred_check_branch
    %20 = sbr.rel (0) target = $region21
  $region20: #{name_lstm_forward.1} parent=0 // pred_region
    _
  $region21: #{name_lstm_forward.1} parent=0 // pred_fallthru
    _
  // Predicated region
  $region22: #{name_lstm_forward.1} parent=0 // pred_check
    _
  $region23: #{name_lstm_forward.1} parent=0 // pred_check_branch
    %22 = sbr.rel (0) target = $region25
  $region24: #{name_lstm_forward.1} parent=0 // pred_region
    _
  $region25: #{name_lstm_forward.1} parent=0 // pred_fallthru
    _
  %v24 = vld [vmem:[%s0] sm:$0xf]
  %v25 = vld [vmem:[%s0 + $0x4] sm:$0xf]
  %v26 = vld [vmem:[%s0 + $0x8] sm:$0xf]
  %v27 = vld [vmem:[%s0 + $0xc] sm:$0xf]
  %v28 = vld [vmem:[%s0 + $0x10] sm:$0xf]
  %v29 = vld [vmem:[%s0 + $0x14] sm:$0xf]
  %v30 = vld [vmem:[%s0 + $0x18] sm:$0xf]
  %v31 = vld [vmem:[%s0 + $0x1c] sm:$0xf]
  %v32 = vld [vmem:[%s1] sm:$0xff]
  %v33 = vld [vmem:[%s1 + $0x8] sm:$0xff]
  %v34 = vld [vmem:[%s1 + $0x10] sm:$0xff]
  %v35 = vld [vmem:[%s1 + $0x18] sm:$0xff]
  %v36 = vld [vmem:[%s1 + $0x20] sm:$0xff]
  %v37 = vld [vmem:[%s1 + $0x28] sm:$0xff]
  %v38 = vld [vmem:[%s1 + $0x30] sm:$0x33]
  %v39 = vld [vmem:[%s1 + $0x38] sm:$0x33]
  %v40 = vld [vmem:[%s3] sm:$0xf]
  %v42 = vlaneseq
  %v43 = vshrl.u32 %v42, 7
  %v44 = vsub.s32 0, %v43
  %v45 = vrot.slane %v40, %v44
  %v46 = vlaneseq
  %v47 = vshrl.u32 %v46, 7
  %v48 = vsub.s32 1, %v47
  %v49 = vrot.slane %v40, %v48
  %v50 = vlaneseq
  %v51 = vshrl.u32 %v50, 7
  %v52 = vsub.s32 2, %v51
  %v53 = vrot.slane %v40, %v52
  %v54 = vlaneseq
  %v55 = vshrl.u32 %v54, 7
  %v56 = vsub.s32 3, %v55
  %v57 = vrot.slane %v40, %v56
  %v70 = vunpack.c.l.b16 %v24
  %v71 = vunpack.c.l.b16 %v25
  %v72 = vunpack.c.l.b16 %v26
  %v73 = vunpack.c.l.b16 %v27
  %v74 = vunpack.c.l.b16 %v28
  %v75 = vunpack.c.l.b16 %v29
  %v76 = vunpack.c.l.b16 %v30
  %v77 = vunpack.c.l.b16 %v31
  %v78 = vpack.c.b16 %v71, %v70
  %v79 = vpack.c.b16 %v73, %v72
  %v80 = vpack.c.b16 %v75, %v74
  %v81 = vpack.c.b16 %v77, %v76
  %v90 = vunpack.c.l.b16 %v32
  %v91 = vunpack.c.h.b16 %v32
  %v92 = vunpack.c.l.b16 %v33
  %v93 = vunpack.c.h.b16 %v33
  %v94 = vunpack.c.l.b16 %v34
  %v95 = vunpack.c.h.b16 %v34
  %v96 = vunpack.c.l.b16 %v35
  %v97 = vunpack.c.h.b16 %v35
  %v98 = vunpack.c.l.b16 %v36
  %v99 = vunpack.c.h.b16 %v36
  %v100 = vunpack.c.l.b16 %v37
  %v101 = vunpack.c.h.b16 %v37
  %v102 = vunpack.c.l.b16 %v38
  %v103 = vunpack.c.h.b16 %v38
  %v104 = vunpack.c.l.b16 %v39
  %v105 = vunpack.c.h.b16 %v39
  %v106 = vpack.c.b16 %v94, %v90
  %v107 = vpack.c.b16 %v95, %v91
  %v108 = vpack.c.b16 %v96, %v92
  %v109 = vpack.c.b16 %v97, %v93
  %v110 = vpack.c.b16 %v102, %v98
  %v111 = vpack.c.b16 %v103, %v99
  %v112 = vpack.c.b16 %v104, %v100
  %v113 = vpack.c.b16 %v105, %v101
  %vm118 = vcmask 220160
  %v120 = vsel %vm118, %v78, 0
  %v123 = vsel %vm118, %v79, 0
  %v126 = vsel %vm118, %v80, 0
  %v129 = vsel %vm118, %v81, 0
  %vm131 = vcmask 1044480
  %vm132 = vcmask 1045504
  %v133 = vsel %vm131, 4294967295, 65535
  %v134 = vsel %vm132, %v133, 0
  %v136 = vand.u32 %v110, %v134
  %v139 = vand.u32 %v111, %v134
  %v142 = vand.u32 %v112, %v134
  %v145 = vand.u32 %v113, %v134
  %147 = vmatprep.subr.bf16.mxu0 %v107
  %148 = vmatpush1.bf16.msra.mxu0 %v106
  %149 = vmatprep.subr.bf16.mxu0 %v139
  %150 = vmatpush1.bf16.msra.mxu0 %v136
  %151 = vmatprep.subr.bf16.mxu0 0
  %152 = vmatpush1.bf16.msra.mxu0 0
  %153 = vmatprep.subr.bf16.mxu0 0
  %154 = vmatpush1.bf16.msra.mxu0 0
  %155 = vmatprep.subr.bf16.mxu0 0
  %156 = vmatpush1.bf16.msra.mxu0 0
  %157 = vmatprep.subr.bf16.mxu0 0
  %158 = vmatpush1.bf16.msra.mxu0 0
  %159 = vmatprep.subr.bf16.mxu0 0
  %160 = vmatpush1.bf16.msra.mxu0 0
  %161 = vmatprep.subr.bf16.mxu0 0
  %162 = vmatpush1.bf16.msra.mxu0 0
  %163 = vmatprep.subr.bf16.mxu0 0
  %164 = vmatpush1.bf16.msra.mxu0 0
  %165 = vmatprep.subr.bf16.mxu0 0
  %166 = vmatpush1.bf16.msra.mxu0 0
  %167 = vmatprep.subr.bf16.mxu0 0
  %168 = vmatpush1.bf16.msra.mxu0 0
  %169 = vmatprep.subr.bf16.mxu0 0
  %170 = vmatpush1.bf16.msra.mxu0 0
  %171 = vmatprep.subr.bf16.mxu0 0
  %172 = vmatpush1.bf16.msra.mxu0 0
  %173 = vmatprep.subr.bf16.mxu0 0
  %174 = vmatpush1.bf16.msra.mxu0 0
  %175 = vmatprep.subr.bf16.mxu0 0
  %176 = vmatpush1.bf16.msra.mxu0 0
  %177 = vmatprep.subr.bf16.mxu0 0
  %178 = vmatpush1.bf16.msra.mxu0 0
  %179 = vmatprep.mubr.bf16.mxu0 0
  %180 = vmatmul.mubr.bf16.gmra.mrb[0].mxu0 %v120
  %v181 = vpop.f32.mrb[0].mxu0
  %v182 = vadd.f32 %v45, %v181
  %v183 = vpop.f32.mrb[0].mxu0
  %v184 = vadd.f32 %v49, %v183
  %v185 = vpop.f32.mrb[0].mxu0
  %v186 = vadd.f32 %v45, %v185
  %v187 = vpop.f32.mrb[0].mxu0
  %v188 = vadd.f32 %v49, %v187
  %189 = vmatprep.mubr.bf16.mxu0 0
  %190 = vmatmul.mubr.bf16.gmra.mrb[0].mxu0 %v123
  %v191 = vpop.f32.mrb[0].mxu0
  %v192 = vadd.f32 %v45, %v191
  %v193 = vpop.f32.mrb[0].mxu0
  %v194 = vadd.f32 %v49, %v193
  %v195 = vpop.f32.mrb[0].mxu0
  %v196 = vadd.f32 %v45, %v195
  %v197 = vpop.f32.mrb[0].mxu0
  %v198 = vadd.f32 %v49, %v197
  %199 = vmatprep.mubr.bf16.mxu0 0
  %200 = vmatmul.mubr.bf16.gmra.mrb[0].mxu0 %v126
  %v201 = vpop.f32.mrb[0].mxu0
  %v202 = vadd.f32 %v45, %v201
  %v203 = vpop.f32.mrb[0].mxu0
  %v204 = vadd.f32 %v49, %v203
  %v205 = vpop.f32.mrb[0].mxu0
  %v206 = vadd.f32 %v45, %v205
  %v207 = vpop.f32.mrb[0].mxu0
  %v208 = vadd.f32 %v49, %v207
  %209 = vmatprep.mubr.bf16.mxu0 0
  %210 = vmatmul.mubr.bf16.gmra.mrb[0].mxu0 %v129
  %v211 = vpop.f32.mrb[0].mxu0
  %v212 = vadd.f32 %v45, %v211
  %v213 = vpop.f32.mrb[0].mxu0
  %v214 = vadd.f32 %v49, %v213
  %v215 = vpop.f32.mrb[0].mxu0
  %v216 = vadd.f32 %v45, %v215
  %v217 = vpop.f32.mrb[0].mxu0
  %v218 = vadd.f32 %v49, %v217
  %219 = vdwg.mxu0
  %220 = vmatprep.subr.bf16.mxu0 %v109
  %221 = vmatpush1.bf16.msra.mxu0 %v108
  %222 = vmatprep.subr.bf16.mxu0 %v145
  %223 = vmatpush1.bf16.msra.mxu0 %v142
  %224 = vmatprep.subr.bf16.mxu0 0
  %225 = vmatpush1.bf16.msra.mxu0 0
  %226 = vmatprep.subr.bf16.mxu0 0
  %227 = vmatpush1.bf16.msra.mxu0 0
  %228 = vmatprep.subr.bf16.mxu0 0
  %229 = vmatpush1.bf16.msra.mxu0 0
  %230 = vmatprep.subr.bf16.mxu0 0
  %231 = vmatpush1.bf16.msra.mxu0 0
  %232 = vmatprep.subr.bf16.mxu0 0
  %233 = vmatpush1.bf16.msra.mxu0 0
  %234 = vmatprep.subr.bf16.mxu0 0
  %235 = vmatpush1.bf16.msra.mxu0 0
  %236 = vmatprep.subr.bf16.mxu0 0
  %237 = vmatpush1.bf16.msra.mxu0 0
  %238 = vmatprep.subr.bf16.mxu0 0
  %239 = vmatpush1.bf16.msra.mxu0 0
  %240 = vmatprep.subr.bf16.mxu0 0
  %241 = vmatpush1.bf16.msra.mxu0 0
  %242 = vmatprep.subr.bf16.mxu0 0
  %243 = vmatpush1.bf16.msra.mxu0 0
  %244 = vmatprep.subr.bf16.mxu0 0
  %245 = vmatpush1.bf16.msra.mxu0 0
  %246 = vmatprep.subr.bf16.mxu0 0
  %247 = vmatpush1.bf16.msra.mxu0 0
  %248 = vmatprep.subr.bf16.mxu0 0
  %249 = vmatpush1.bf16.msra.mxu0 0
  %250 = vmatprep.subr.bf16.mxu0 0
  %251 = vmatpush1.bf16.msra.mxu0 0
  %252 = vmatprep.mubr.bf16.mxu0 0
  %253 = vmatmul.mubr.bf16.gmra.mrb[0].mxu0 %v120
  %v254 = vpop.f32.mrb[0].mxu0
  %v255 = vadd.f32 %v53, %v254
  %v256 = vpop.f32.mrb[0].mxu0
  %v257 = vadd.f32 %v57, %v256
  %v258 = vpop.f32.mrb[0].mxu0
  %v259 = vadd.f32 %v53, %v258
  %v260 = vpop.f32.mrb[0].mxu0
  %v261 = vadd.f32 %v57, %v260
  %262 = vmatprep.mubr.bf16.mxu0 0
  %263 = vmatmul.mubr.bf16.gmra.mrb[0].mxu0 %v123
  %v264 = vpop.f32.mrb[0].mxu0
  %v265 = vadd.f32 %v53, %v264
  %v266 = vpop.f32.mrb[0].mxu0
  %v267 = vadd.f32 %v57, %v266
  %v268 = vpop.f32.mrb[0].mxu0
  %v269 = vadd.f32 %v53, %v268
  %v270 = vpop.f32.mrb[0].mxu0
  %v271 = vadd.f32 %v57, %v270
  %272 = vmatprep.mubr.bf16.mxu0 0
  %273 = vmatmul.mubr.bf16.gmra.mrb[0].mxu0 %v126
  %v274 = vpop.f32.mrb[0].mxu0
  %v275 = vadd.f32 %v53, %v274
  %v276 = vpop.f32.mrb[0].mxu0
  %v277 = vadd.f32 %v57, %v276
  %v278 = vpop.f32.mrb[0].mxu0
  %v279 = vadd.f32 %v53, %v278
  %v280 = vpop.f32.mrb[0].mxu0
  %v281 = vadd.f32 %v57, %v280
  %282 = vmatprep.mubr.bf16.mxu0 0
  %283 = vmatmul.mubr.bf16.gmra.mrb[0].mxu0 %v129
  %v284 = vpop.f32.mrb[0].mxu0
  %v285 = vadd.f32 %v53, %v284
  %v286 = vpop.f32.mrb[0].mxu0
  %v287 = vadd.f32 %v57, %v286
  %v288 = vpop.f32.mrb[0].mxu0
  %v289 = vadd.f32 %v53, %v288
  %v290 = vpop.f32.mrb[0].mxu0
  %v291 = vadd.f32 %v57, %v290
  %292 = vdwg.mxu0
  %293 = vst [vmem:[#allocation2] sm:$0xff] %v182
  %294 = vst [vmem:[#allocation2 + $0x8] sm:$0xff] %v184
  %295 = vst [vmem:[#allocation2 + $0x10] sm:$0xff] %v255
  %296 = vst [vmem:[#allocation2 + $0x18] sm:$0xff] %v257
  %297 = vst [vmem:[#allocation2 + $0x20] sm:$0xff] %v186
  %298 = vst [vmem:[#allocation2 + $0x28] sm:$0xff] %v188
  %299 = vst [vmem:[#allocation2 + $0x30] sm:$0xff] %v259
  %300 = vst [vmem:[#allocation2 + $0x38] sm:$0xff] %v261
  %301 = vst [vmem:[#allocation2 + $0x40] sm:$0xff] %v192
  %302 = vst [vmem:[#allocation2 + $0x48] sm:$0xff] %v194
  %303 = vst [vmem:[#allocation2 + $0x50] sm:$0xff] %v265
  %304 = vst [vmem:[#allocation2 + $0x58] sm:$0xff] %v267
  %305 = vst [vmem:[#allocation2 + $0x60] sm:$0xff] %v196
  %306 = vst [vmem:[#allocation2 + $0x68] sm:$0xff] %v198
  %307 = vst [vmem:[#allocation2 + $0x70] sm:$0xff] %v269
  %308 = vst [vmem:[#allocation2 + $0x78] sm:$0xff] %v271
  %309 = vst [vmem:[#allocation2 + $0x80] sm:$0xff] %v202
  %310 = vst [vmem:[#allocation2 + $0x88] sm:$0xff] %v204
  %311 = vst [vmem:[#allocation2 + $0x90] sm:$0xff] %v275
  %312 = vst [vmem:[#allocation2 + $0x98] sm:$0xff] %v277
  %313 = vst [vmem:[#allocation2 + $0xa0] sm:$0xff] %v206
  %314 = vst [vmem:[#allocation2 + $0xa8] sm:$0xff] %v208
  %315 = vst [vmem:[#allocation2 + $0xb0] sm:$0xff] %v279
  %316 = vst [vmem:[#allocation2 + $0xb8] sm:$0xff] %v281
  %317 = vst [vmem:[#allocation2 + $0xc0] sm:$0xff] %v212
  %318 = vst [vmem:[#allocation2 + $0xc8] sm:$0xff] %v214
  %319 = vst [vmem:[#allocation2 + $0xd0] sm:$0xff] %v285
  %320 = vst [vmem:[#allocation2 + $0xd8] sm:$0xff] %v287
  %321 = vst [vmem:[#allocation2 + $0xe0] sm:$0xff] %v216
  %322 = vst [vmem:[#allocation2 + $0xe8] sm:$0xff] %v218
  %323 = vst [vmem:[#allocation2 + $0xf0] sm:$0xff] %v289
  %324 = vst [vmem:[#allocation2 + $0xf8] sm:$0xff] %v291
  %v325 = vld [vmem:[%s2] sm:$0xff]
  %v326 = vld [vmem:[%s2 + $0x8] sm:$0xff]
  %v327 = vld [vmem:[%s2 + $0x10] sm:$0xff]
  %v328 = vld [vmem:[%s2 + $0x18] sm:$0xff]
  %v329 = vld [vmem:[%s2 + $0x20] sm:$0xff]
  %v330 = vld [vmem:[%s2 + $0x28] sm:$0xff]
  %v331 = vld [vmem:[%s2 + $0x30] sm:$0xff]
  %v332 = vld [vmem:[%s2 + $0x38] sm:$0xff]
  %v333 = vld [vmem:[%s2 + $0x40] sm:$0xff]
  %v334 = vld [vmem:[%s2 + $0x48] sm:$0xff]
  %v335 = vld [vmem:[%s2 + $0x50] sm:$0xff]
  %v336 = vld [vmem:[%s2 + $0x58] sm:$0xff]
  %v337 = vld [vmem:[%s2 + $0x60] sm:$0xff]
  %v338 = vld [vmem:[%s2 + $0x68] sm:$0xff]
  %v339 = vld [vmem:[%s2 + $0x70] sm:$0xff]
  %v340 = vld [vmem:[%s2 + $0x78] sm:$0xff]
  %v341 = vld [vmem:[%s2 + $0x80] sm:$0xff]
  %v342 = vld [vmem:[%s2 + $0x88] sm:$0xff]
  %v343 = vld [vmem:[%s2 + $0x90] sm:$0xff]
  %v344 = vld [vmem:[%s2 + $0x98] sm:$0xff]
  %v345 = vld [vmem:[%s2 + $0xa0] sm:$0xff]
  %v346 = vld [vmem:[%s2 + $0xa8] sm:$0xff]
  %v347 = vld [vmem:[%s2 + $0xb0] sm:$0xff]
  %v348 = vld [vmem:[%s2 + $0xb8] sm:$0xff]
  %v349 = vld [vmem:[%s2 + $0xc0] sm:$0xff]
  %v350 = vld [vmem:[%s2 + $0xc8] sm:$0xff]
  %v351 = vld [vmem:[%s2 + $0xd0] sm:$0xff]
  %v352 = vld [vmem:[%s2 + $0xd8] sm:$0xff]
  %v353 = vld [vmem:[%s2 + $0xe0] sm:$0xff]
  %v354 = vld [vmem:[%s2 + $0xe8] sm:$0xff]
  %v355 = vld [vmem:[%s2 + $0xf0] sm:$0xff]
  %v356 = vld [vmem:[%s2 + $0xf8] sm:$0xff]
  %s357 = smul.u32 0, 4
  %s358 = smul.addr %s357, 8
  %s359 = scalar_lea.vmem [#allocation2], %s358
  %v360 = vld [vmem:[%s359] sm:$0xff]
  %v361 = vld [vmem:[%s359 + $0x8] sm:$0xff]
  %v362 = vld [vmem:[%s359 + $0x10] sm:$0xff]
  %v363 = vld [vmem:[%s359 + $0x18] sm:$0xff]
  %v396 = vunpack.c.l.b16 %v325
  %v397 = vunpack.c.h.b16 %v325
  %v398 = vunpack.c.l.b16 %v326
  %v399 = vunpack.c.h.b16 %v326
  %v400 = vunpack.c.l.b16 %v327
  %v401 = vunpack.c.h.b16 %v327
  %v402 = vunpack.c.l.b16 %v328
  %v403 = vunpack.c.h.b16 %v328
  %v404 = vunpack.c.l.b16 %v329
  %v405 = vunpack.c.h.b16 %v329
  %v406 = vunpack.c.l.b16 %v330
  %v407 = vunpack.c.h.b16 %v330
  %v408 = vunpack.c.l.b16 %v331
  %v409 = vunpack.c.h.b16 %v331
  %v410 = vunpack.c.l.b16 %v332
  %v411 = vunpack.c.h.b16 %v332
  %v412 = vunpack.c.l.b16 %v333
  %v413 = vunpack.c.h.b16 %v333
  %v414 = vunpack.c.l.b16 %v334
  %v415 = vunpack.c.h.b16 %v334
  %v416 = vunpack.c.l.b16 %v335
  %v417 = vunpack.c.h.b16 %v335
  %v418 = vunpack.c.l.b16 %v336
  %v419 = vunpack.c.h.b16 %v336
  %v420 = vunpack.c.l.b16 %v337
  %v421 = vunpack.c.h.b16 %v337
  %v422 = vunpack.c.l.b16 %v338
  %v423 = vunpack.c.h.b16 %v338
  %v424 = vunpack.c.l.b16 %v339
  %v425 = vunpack.c.h.b16 %v339
  %v426 = vunpack.c.l.b16 %v340
  %v427 = vunpack.c.h.b16 %v340
  %v428 = vunpack.c.l.b16 %v341
  %v429 = vunpack.c.h.b16 %v341
  %v430 = vunpack.c.l.b16 %v342
  %v431 = vunpack.c.h.b16 %v342
  %v432 = vunpack.c.l.b16 %v343
  %v433 = vunpack.c.h.b16 %v343
  %v434 = vunpack.c.l.b16 %v344
  %v435 = vunpack.c.h.b16 %v344
  %v436 = vunpack.c.l.b16 %v345
  %v437 = vunpack.c.h.b16 %v345
  %v438 = vunpack.c.l.b16 %v346
  %v439 = vunpack.c.h.b16 %v346
  %v440 = vunpack.c.l.b16 %v347
  %v441 = vunpack.c.h.b16 %v347
  %v442 = vunpack.c.l.b16 %v348
  %v443 = vunpack.c.h.b16 %v348
  %v444 = vunpack.c.l.b16 %v349
  %v445 = vunpack.c.h.b16 %v349
  %v446 = vunpack.c.l.b16 %v350
  %v447 = vunpack.c.h.b16 %v350
  %v448 = vunpack.c.l.b16 %v351
  %v449 = vunpack.c.h.b16 %v351
  %v450 = vunpack.c.l.b16 %v352
  %v451 = vunpack.c.h.b16 %v352
  %v452 = vunpack.c.l.b16 %v353
  %v453 = vunpack.c.h.b16 %v353
  %v454 = vunpack.c.l.b16 %v354
  %v455 = vunpack.c.h.b16 %v354
  %v456 = vunpack.c.l.b16 %v355
  %v457 = vunpack.c.h.b16 %v355
  %v458 = vunpack.c.l.b16 %v356
  %v459 = vunpack.c.h.b16 %v356
  %v460 = vpack.c.b16 %v400, %v396
  %v461 = vpack.c.b16 %v401, %v397
  %v462 = vpack.c.b16 %v402, %v398
  %v463 = vpack.c.b16 %v403, %v399
  %v464 = vpack.c.b16 %v408, %v404
  %v465 = vpack.c.b16 %v409, %v405
  %v466 = vpack.c.b16 %v410, %v406
  %v467 = vpack.c.b16 %v411, %v407
  %v468 = vpack.c.b16 %v416, %v412
  %v469 = vpack.c.b16 %v417, %v413
  %v470 = vpack.c.b16 %v418, %v414
  %v471 = vpack.c.b16 %v419, %v415
  %v472 = vpack.c.b16 %v424, %v420
  %v473 = vpack.c.b16 %v425, %v421
  %v474 = vpack.c.b16 %v426, %v422
  %v475 = vpack.c.b16 %v427, %v423
  %v476 = vpack.c.b16 %v432, %v428
  %v477 = vpack.c.b16 %v433, %v429
  %v478 = vpack.c.b16 %v434, %v430
  %v479 = vpack.c.b16 %v435, %v431
  %v480 = vpack.c.b16 %v440, %v436
  %v481 = vpack.c.b16 %v441, %v437
  %v482 = vpack.c.b16 %v442, %v438
  %v483 = vpack.c.b16 %v443, %v439
  %v484 = vpack.c.b16 %v448, %v444
  %v485 = vpack.c.b16 %v449, %v445
  %v486 = vpack.c.b16 %v450, %v446
  %v487 = vpack.c.b16 %v451, %v447
  %v488 = vpack.c.b16 %v456, %v452
  %v489 = vpack.c.b16 %v457, %v453
  %v490 = vpack.c.b16 %v458, %v454
  %v491 = vpack.c.b16 %v459, %v455
  %524 = vmatprep.subr.bf16.mxu0 %v461
  %525 = vmatpush1.bf16.msra.mxu0 %v460
  %526 = vmatprep.subr.bf16.mxu0 %v465
  %527 = vmatpush1.bf16.msra.mxu0 %v464
  %528 = vmatprep.subr.bf16.mxu0 %v469
  %529 = vmatpush1.bf16.msra.mxu0 %v468
  %530 = vmatprep.subr.bf16.mxu0 %v473
  %531 = vmatpush1.bf16.msra.mxu0 %v472
  %532 = vmatprep.subr.bf16.mxu0 %v477
  %533 = vmatpush1.bf16.msra.mxu0 %v476
  %534 = vmatprep.subr.bf16.mxu0 %v481
  %535 = vmatpush1.bf16.msra.mxu0 %v480
  %536 = vmatprep.subr.bf16.mxu0 %v485
  %537 = vmatpush1.bf16.msra.mxu0 %v484
  %538 = vmatprep.subr.bf16.mxu0 %v489
  %539 = vmatpush1.bf16.msra.mxu0 %v488
  %540 = vmatprep.subr.bf16.mxu0 0
  %541 = vmatpush1.bf16.msra.mxu0 0
  %542 = vmatprep.subr.bf16.mxu0 0
  %543 = vmatpush1.bf16.msra.mxu0 0
  %544 = vmatprep.subr.bf16.mxu0 0
  %545 = vmatpush1.bf16.msra.mxu0 0
  %546 = vmatprep.subr.bf16.mxu0 0
  %547 = vmatpush1.bf16.msra.mxu0 0
  %548 = vmatprep.subr.bf16.mxu0 0
  %549 = vmatpush1.bf16.msra.mxu0 0
  %550 = vmatprep.subr.bf16.mxu0 0
  %551 = vmatpush1.bf16.msra.mxu0 0
  %552 = vmatprep.subr.bf16.mxu0 0
  %553 = vmatpush1.bf16.msra.mxu0 0
  %554 = vmatprep.subr.bf16.mxu0 0
  %555 = vmatpush1.bf16.msra.mxu0 0
  %556 = vmatprep.mubr.bf16.mxu0 0
  %557 = vmatmul.mubr.bf16.gmra.mrb[0].mxu0 0
  %v558 = vpop.f32.mrb[0].mxu0
  %v559 = vadd.f32 0.0, %v558
  %v560 = vpop.f32.mrb[0].mxu0
  %v561 = vadd.f32 0.0, %v560
  %v562 = vpop.f32.mrb[0].mxu0
  %v563 = vpop.f32.mrb[0].mxu0
  %564 = vdwg.mxu0
  %565 = vmatprep.subr.bf16.mxu0 %v463
  %566 = vmatpush1.bf16.msra.mxu0 %v462
  %567 = vmatprep.subr.bf16.mxu0 %v467
  %568 = vmatpush1.bf16.msra.mxu0 %v466
  %569 = vmatprep.subr.bf16.mxu0 %v471
  %570 = vmatpush1.bf16.msra.mxu0 %v470
  %571 = vmatprep.subr.bf16.mxu0 %v475
  %572 = vmatpush1.bf16.msra.mxu0 %v474
  %573 = vmatprep.subr.bf16.mxu0 %v479
  %574 = vmatpush1.bf16.msra.mxu0 %v478
  %575 = vmatprep.subr.bf16.mxu0 %v483
  %576 = vmatpush1.bf16.msra.mxu0 %v482
  %577 = vmatprep.subr.bf16.mxu0 %v487
  %578 = vmatpush1.bf16.msra.mxu0 %v486
  %579 = vmatprep.subr.bf16.mxu0 %v491
  %580 = vmatpush1.bf16.msra.mxu0 %v490
  %581 = vmatprep.subr.bf16.mxu0 0
  %582 = vmatpush1.bf16.msra.mxu0 0
  %583 = vmatprep.subr.bf16.mxu0 0
  %584 = vmatpush1.bf16.msra.mxu0 0
  %585 = vmatprep.subr.bf16.mxu0 0
  %586 = vmatpush1.bf16.msra.mxu0 0
  %587 = vmatprep.subr.bf16.mxu0 0
  %588 = vmatpush1.bf16.msra.mxu0 0
  %589 = vmatprep.subr.bf16.mxu0 0
  %590 = vmatpush1.bf16.msra.mxu0 0
  %591 = vmatprep.subr.bf16.mxu0 0
  %592 = vmatpush1.bf16.msra.mxu0 0
  %593 = vmatprep.subr.bf16.mxu0 0
  %594 = vmatpush1.bf16.msra.mxu0 0
  %595 = vmatprep.subr.bf16.mxu0 0
  %596 = vmatpush1.bf16.msra.mxu0 0
  %597 = vmatprep.mubr.bf16.mxu0 0
  %598 = vmatmul.mubr.bf16.gmra.mrb[0].mxu0 0
  %v599 = vpop.f32.mrb[0].mxu0
  %v600 = vadd.f32 0.0, %v599
  %v601 = vpop.f32.mrb[0].mxu0
  %v602 = vadd.f32 0.0, %v601
  %v603 = vpop.f32.mrb[0].mxu0
  %v604 = vpop.f32.mrb[0].mxu0
  %605 = vdwg.mxu0
  %v606 = vadd.f32 %v360, %v559
  %v607 = vadd.f32 %v361, %v561
  %v608 = vadd.f32 %v362, %v600
  %v609 = vadd.f32 %v363, %v602
  %v610 = vmul.f32 %v606, 0.5
  %v611 = vtanh.pop %v610
  %v612 = vmul.f32 %v611, 0.5
  %v613 = vadd.f32 %v612, 0.5
  %v614 = vmul.f32 %v607, 0.5
  %v615 = vtanh.pop %v614
  %v616 = vmul.f32 %v615, 0.5
  %v617 = vadd.f32 %v616, 0.5
  %v618 = vtanh.pop %v608
  %v619 = vmul.f32 %v609, 0.5
  %v620 = vtanh.pop %v619
  %v621 = vmul.f32 %v620, 0.5
  %v622 = vadd.f32 %v621, 0.5
  %v623 = vmul.f32 %v617, 0.0
  %v624 = vmul.f32 %v613, %v618
  %v625 = vadd.f32 %v623, %v624
  %v626 = vtanh.pop %v625
  %v627 = vmul.f32 %v622, %v626
  %628 = vst [vmem:[#allocation3] sm:$0xff] %v627
  %s629 = smul.u32 1, 4
  %s630 = smul.addr %s629, 8
  %s631 = scalar_lea.vmem [#allocation2], %s630
  %v632 = vld [vmem:[%s631] sm:$0xff]
  %v633 = vld [vmem:[%s631 + $0x8] sm:$0xff]
  %v634 = vld [vmem:[%s631 + $0x10] sm:$0xff]
  %v635 = vld [vmem:[%s631 + $0x18] sm:$0xff]
  %v636 = vpack.c.bf16 %v627, %v627
  %637 = vmatprep.subr.bf16.mxu0 %v461
  %638 = vmatpush1.bf16.msra.mxu0 %v460
  %639 = vmatprep.subr.bf16.mxu0 %v465
  %640 = vmatpush1.bf16.msra.mxu0 %v464
  %641 = vmatprep.subr.bf16.mxu0 %v469
  %642 = vmatpush1.bf16.msra.mxu0 %v468
  %643 = vmatprep.subr.bf16.mxu0 %v473
  %644 = vmatpush1.bf16.msra.mxu0 %v472
  %645 = vmatprep.subr.bf16.mxu0 %v477
  %646 = vmatpush1.bf16.msra.mxu0 %v476
  %647 = vmatprep.subr.bf16.mxu0 %v481
  %648 = vmatpush1.bf16.msra.mxu0 %v480
  %649 = vmatprep.subr.bf16.mxu0 %v485
  %650 = vmatpush1.bf16.msra.mxu0 %v484
  %651 = vmatprep.subr.bf16.mxu0 %v489
  %652 = vmatpush1.bf16.msra.mxu0 %v488
  %653 = vmatprep.subr.bf16.mxu0 0
  %654 = vmatpush1.bf16.msra.mxu0 0
  %655 = vmatprep.subr.bf16.mxu0 0
  %656 = vmatpush1.bf16.msra.mxu0 0
  %657 = vmatprep.subr.bf16.mxu0 0
  %658 = vmatpush1.bf16.msra.mxu0 0
  %659 = vmatprep.subr.bf16.mxu0 0
  %660 = vmatpush1.bf16.msra.mxu0 0
  %661 = vmatprep.subr.bf16.mxu0 0
  %662 = vmatpush1.bf16.msra.mxu0 0
  %663 = vmatprep.subr.bf16.mxu0 0
  %664 = vmatpush1.bf16.msra.mxu0 0
  %665 = vmatprep.subr.bf16.mxu0 0
  %666 = vmatpush1.bf16.msra.mxu0 0
  %667 = vmatprep.subr.bf16.mxu0 0
  %668 = vmatpush1.bf16.msra.mxu0 0
  %669 = vmatprep.mubr.bf16.mxu0 0
  %670 = vmatmul.mubr.bf16.gmra.mrb[0].mxu0 %v636
  %v671 = vpop.f32.mrb[0].mxu0
  %v672 = vadd.f32 0.0, %v671
  %v673 = vpop.f32.mrb[0].mxu0
  %v674 = vadd.f32 0.0, %v673
  %v675 = vpop.f32.mrb[0].mxu0
  %v676 = vpop.f32.mrb[0].mxu0
  %677 = vdwg.mxu0
  %678 = vmatprep.subr.bf16.mxu0 %v463
  %679 = vmatpush1.bf16.msra.mxu0 %v462
  %680 = vmatprep.subr.bf16.mxu0 %v467
  %681 = vmatpush1.bf16.msra.mxu0 %v466
  %682 = vmatprep.subr.bf16.mxu0 %v471
  %683 = vmatpush1.bf16.msra.mxu0 %v470
  %684 = vmatprep.subr.bf16.mxu0 %v475
  %685 = vmatpush1.bf16.msra.mxu0 %v474
  %686 = vmatprep.subr.bf16.mxu0 %v479
  %687 = vmatpush1.bf16.msra.mxu0 %v478
  %688 = vmatprep.subr.bf16.mxu0 %v483
  %689 = vmatpush1.bf16.msra.mxu0 %v482
  %690 = vmatprep.subr.bf16.mxu0 %v487
  %691 = vmatpush1.bf16.msra.mxu0 %v486
  %692 = vmatprep.subr.bf16.mxu0 %v491
  %693 = vmatpush1.bf16.msra.mxu0 %v490
  %694 = vmatprep.subr.bf16.mxu0 0
  %695 = vmatpush1.bf16.msra.mxu0 0
  %696 = vmatprep.subr.bf16.mxu0 0
  %697 = vmatpush1.bf16.msra.mxu0 0
  %698 = vmatprep.subr.bf16.mxu0 0
  %699 = vmatpush1.bf16.msra.mxu0 0
  %700 = vmatprep.subr.bf16.mxu0 0
  %701 = vmatpush1.bf16.msra.mxu0 0
  %702 = vmatprep.subr.bf16.mxu0 0
  %703 = vmatpush1.bf16.msra.mxu0 0
  %704 = vmatprep.subr.bf16.mxu0 0
  %705 = vmatpush1.bf16.msra.mxu0 0
  %706 = vmatprep.subr.bf16.mxu0 0
  %707 = vmatpush1.bf16.msra.mxu0 0
  %708 = vmatprep.subr.bf16.mxu0 0
  %709 = vmatpush1.bf16.msra.mxu0 0
  %710 = vmatprep.mubr.bf16.mxu0 0
  %711 = vmatmul.mubr.bf16.gmra.mrb[0].mxu0 %v636
  %v712 = vpop.f32.mrb[0].mxu0
  %v713 = vadd.f32 0.0, %v712
  %v714 = vpop.f32.mrb[0].mxu0
  %v715 = vadd.f32 0.0, %v714
  %v716 = vpop.f32.mrb[0].mxu0
  %v717 = vpop.f32.mrb[0].mxu0
  %718 = vdwg.mxu0
  %v719 = vadd.f32 %v632, %v672
  %v720 = vadd.f32 %v633, %v674
  %v721 = vadd.f32 %v634, %v713
  %v722 = vadd.f32 %v635, %v715
  %v723 = vmul.f32 %v719, 0.5
  %v724 = vtanh.pop %v723
  %v725 = vmul.f32 %v724, 0.5
  %v726 = vadd.f32 %v725, 0.5
  %v727 = vmul.f32 %v720, 0.5
  %v728 = vtanh.pop %v727
  %v729 = vmul.f32 %v728, 0.5
  %v730 = vadd.f32 %v729, 0.5
  %v731 = vtanh.pop %v721
  %v732 = vmul.f32 %v722, 0.5
  %v733 = vtanh.pop %v732
  %v734 = vmul.f32 %v733, 0.5
  %v735 = vadd.f32 %v734, 0.5
  %v736 = vmul.f32 %v730, %v625
  %v737 = vmul.f32 %v726, %v731
  %v738 = vadd.f32 %v736, %v737
  %v739 = vtanh.pop %v738
  %v740 = vmul.f32 %v735, %v739
  %s741 = scalar_lea.vmem [#allocation3], 8
  %742 = vst [vmem:[%s741] sm:$0xff] %v740
  %s743 = smul.u32 2, 4
  %s744 = smul.addr %s743, 8
  %s745 = scalar_lea.vmem [#allocation2], %s744
  %v746 = vld [vmem:[%s745] sm:$0xff]
  %v747 = vld [vmem:[%s745 + $0x8] sm:$0xff]
  %v748 = vld [vmem:[%s745 + $0x10] sm:$0xff]
  %v749 = vld [vmem:[%s745 + $0x18] sm:$0xff]
  %v750 = vpack.c.bf16 %v740, %v740
  %751 = vmatprep.subr.bf16.mxu0 %v461
  %752 = vmatpush1.bf16.msra.mxu0 %v460
  %753 = vmatprep.subr.bf16.mxu0 %v465
  %754 = vmatpush1.bf16.msra.mxu0 %v464
  %755 = vmatprep.subr.bf16.mxu0 %v469
  %756 = vmatpush1.bf16.msra.mxu0 %v468
  %757 = vmatprep.subr.bf16.mxu0 %v473
  %758 = vmatpush1.bf16.msra.mxu0 %v472
  %759 = vmatprep.subr.bf16.mxu0 %v477
  %760 = vmatpush1.bf16.msra.mxu0 %v476
  %761 = vmatprep.subr.bf16.mxu0 %v481
  %762 = vmatpush1.bf16.msra.mxu0 %v480
  %763 = vmatprep.subr.bf16.mxu0 %v485
  %764 = vmatpush1.bf16.msra.mxu0 %v484
  %765 = vmatprep.subr.bf16.mxu0 %v489
  %766 = vmatpush1.bf16.msra.mxu0 %v488
  %767 = vmatprep.subr.bf16.mxu0 0
  %768 = vmatpush1.bf16.msra.mxu0 0
  %769 = vmatprep.subr.bf16.mxu0 0
  %770 = vmatpush1.bf16.msra.mxu0 0
  %771 = vmatprep.subr.bf16.mxu0 0
  %772 = vmatpush1.bf16.msra.mxu0 0
  %773 = vmatprep.subr.bf16.mxu0 0
  %774 = vmatpush1.bf16.msra.mxu0 0
  %775 = vmatprep.subr.bf16.mxu0 0
  %776 = vmatpush1.bf16.msra.mxu0 0
  %777 = vmatprep.subr.bf16.mxu0 0
  %778 = vmatpush1.bf16.msra.mxu0 0
  %779 = vmatprep.subr.bf16.mxu0 0
  %780 = vmatpush1.bf16.msra.mxu0 0
  %781 = vmatprep.subr.bf16.mxu0 0
  %782 = vmatpush1.bf16.msra.mxu0 0
  %783 = vmatprep.mubr.bf16.mxu0 0
  %784 = vmatmul.mubr.bf16.gmra.mrb[0].mxu0 %v750
  %v785 = vpop.f32.mrb[0].mxu0
  %v786 = vadd.f32 0.0, %v785
  %v787 = vpop.f32.mrb[0].mxu0
  %v788 = vadd.f32 0.0, %v787
  %v789 = vpop.f32.mrb[0].mxu0
  %v790 = vpop.f32.mrb[0].mxu0
  %791 = vdwg.mxu0
  %792 = vmatprep.subr.bf16.mxu0 %v463
  %793 = vmatpush1.bf16.msra.mxu0 %v462
  %794 = vmatprep.subr.bf16.mxu0 %v467
  %795 = vmatpush1.bf16.msra.mxu0 %v466
  %796 = vmatprep.subr.bf16.mxu0 %v471
  %797 = vmatpush1.bf16.msra.mxu0 %v470
  %798 = vmatprep.subr.bf16.mxu0 %v475
  %799 = vmatpush1.bf16.msra.mxu0 %v474
  %800 = vmatprep.subr.bf16.mxu0 %v479
  %801 = vmatpush1.bf16.msra.mxu0 %v478
  %802 = vmatprep.subr.bf16.mxu0 %v483
  %803 = vmatpush1.bf16.msra.mxu0 %v482
  %804 = vmatprep.subr.bf16.mxu0 %v487
  %805 = vmatpush1.bf16.msra.mxu0 %v486
  %806 = vmatprep.subr.bf16.mxu0 %v491
  %807 = vmatpush1.bf16.msra.mxu0 %v490
  %808 = vmatprep.subr.bf16.mxu0 0
  %809 = vmatpush1.bf16.msra.mxu0 0
  %810 = vmatprep.subr.bf16.mxu0 0
  %811 = vmatpush1.bf16.msra.mxu0 0
  %812 = vmatprep.subr.bf16.mxu0 0
  %813 = vmatpush1.bf16.msra.mxu0 0
  %814 = vmatprep.subr.bf16.mxu0 0
  %815 = vmatpush1.bf16.msra.mxu0 0
  %816 = vmatprep.subr.bf16.mxu0 0
  %817 = vmatpush1.bf16.msra.mxu0 0
  %818 = vmatprep.subr.bf16.mxu0 0
  %819 = vmatpush1.bf16.msra.mxu0 0
  %820 = vmatprep.subr.bf16.mxu0 0
  %821 = vmatpush1.bf16.msra.mxu0 0
  %822 = vmatprep.subr.bf16.mxu0 0
  %823 = vmatpush1.bf16.msra.mxu0 0
  %824 = vmatprep.mubr.bf16.mxu0 0
  %825 = vmatmul.mubr.bf16.gmra.mrb[0].mxu0 %v750
  %v826 = vpop.f32.mrb[0].mxu0
  %v827 = vadd.f32 0.0, %v826
  %v828 = vpop.f32.mrb[0].mxu0
  %v829 = vadd.f32 0.0, %v828
  %v830 = vpop.f32.mrb[0].mxu0
  %v831 = vpop.f32.mrb[0].mxu0
  %832 = vdwg.mxu0
  %v833 = vadd.f32 %v746, %v786
  %v834 = vadd.f32 %v747, %v788
  %v835 = vadd.f32 %v748, %v827
  %v836 = vadd.f32 %v749, %v829
  %v837 = vmul.f32 %v833, 0.5
  %v838 = vtanh.pop %v837
  %v839 = vmul.f32 %v838, 0.5
  %v840 = vadd.f32 %v839, 0.5
  %v841 = vmul.f32 %v834, 0.5
  %v842 = vtanh.pop %v841
  %v843 = vmul.f32 %v842, 0.5
  %v844 = vadd.f32 %v843, 0.5
  %v845 = vtanh.pop %v835
  %v846 = vmul.f32 %v836, 0.5
  %v847 = vtanh.pop %v846
  %v848 = vmul.f32 %v847, 0.5
  %v849 = vadd.f32 %v848, 0.5
  %v850 = vmul.f32 %v844, %v738
  %v851 = vmul.f32 %v840, %v845
  %v852 = vadd.f32 %v850, %v851
  %v853 = vtanh.pop %v852
  %v854 = vmul.f32 %v849, %v853
  %s855 = scalar_lea.vmem [#allocation3], 16
  %856 = vst [vmem:[%s855] sm:$0xff] %v854
  %s857 = smul.u32 3, 4
  %s858 = smul.addr %s857, 8
  %s859 = scalar_lea.vmem [#allocation2], %s858
  %v860 = vld [vmem:[%s859] sm:$0xff]
  %v861 = vld [vmem:[%s859 + $0x8] sm:$0xff]
  %v862 = vld [vmem:[%s859 + $0x10] sm:$0xff]
  %v863 = vld [vmem:[%s859 + $0x18] sm:$0xff]
  %v864 = vpack.c.bf16 %v854, %v854
  %865 = vmatprep.subr.bf16.mxu0 %v461
  %866 = vmatpush1.bf16.msra.mxu0 %v460
  %867 = vmatprep.subr.bf16.mxu0 %v465
  %868 = vmatpush1.bf16.msra.mxu0 %v464
  %869 = vmatprep.subr.bf16.mxu0 %v469
  %870 = vmatpush1.bf16.msra.mxu0 %v468
  %871 = vmatprep.subr.bf16.mxu0 %v473
  %872 = vmatpush1.bf16.msra.mxu0 %v472
  %873 = vmatprep.subr.bf16.mxu0 %v477
  %874 = vmatpush1.bf16.msra.mxu0 %v476
  %875 = vmatprep.subr.bf16.mxu0 %v481
  %876 = vmatpush1.bf16.msra.mxu0 %v480
  %877 = vmatprep.subr.bf16.mxu0 %v485
  %878 = vmatpush1.bf16.msra.mxu0 %v484
  %879 = vmatprep.subr.bf16.mxu0 %v489
  %880 = vmatpush1.bf16.msra.mxu0 %v488
  %881 = vmatprep.subr.bf16.mxu0 0
  %882 = vmatpush1.bf16.msra.mxu0 0
  %883 = vmatprep.subr.bf16.mxu0 0
  %884 = vmatpush1.bf16.msra.mxu0 0
  %885 = vmatprep.subr.bf16.mxu0 0
  %886 = vmatpush1.bf16.msra.mxu0 0
  %887 = vmatprep.subr.bf16.mxu0 0
  %888 = vmatpush1.bf16.msra.mxu0 0
  %889 = vmatprep.subr.bf16.mxu0 0
  %890 = vmatpush1.bf16.msra.mxu0 0
  %891 = vmatprep.subr.bf16.mxu0 0
  %892 = vmatpush1.bf16.msra.mxu0 0
  %893 = vmatprep.subr.bf16.mxu0 0
  %894 = vmatpush1.bf16.msra.mxu0 0
  %895 = vmatprep.subr.bf16.mxu0 0
  %896 = vmatpush1.bf16.msra.mxu0 0
  %897 = vmatprep.mubr.bf16.mxu0 0
  %898 = vmatmul.mubr.bf16.gmra.mrb[0].mxu0 %v864
  %v899 = vpop.f32.mrb[0].mxu0
  %v900 = vadd.f32 0.0, %v899
  %v901 = vpop.f32.mrb[0].mxu0
  %v902 = vadd.f32 0.0, %v901
  %v903 = vpop.f32.mrb[0].mxu0
  %v904 = vpop.f32.mrb[0].mxu0
  %905 = vdwg.mxu0
  %906 = vmatprep.subr.bf16.mxu0 %v463
  %907 = vmatpush1.bf16.msra.mxu0 %v462
  %908 = vmatprep.subr.bf16.mxu0 %v467
  %909 = vmatpush1.bf16.msra.mxu0 %v466
  %910 = vmatprep.subr.bf16.mxu0 %v471
  %911 = vmatpush1.bf16.msra.mxu0 %v470
  %912 = vmatprep.subr.bf16.mxu0 %v475
  %913 = vmatpush1.bf16.msra.mxu0 %v474
  %914 = vmatprep.subr.bf16.mxu0 %v479
  %915 = vmatpush1.bf16.msra.mxu0 %v478
  %916 = vmatprep.subr.bf16.mxu0 %v483
  %917 = vmatpush1.bf16.msra.mxu0 %v482
  %918 = vmatprep.subr.bf16.mxu0 %v487
  %919 = vmatpush1.bf16.msra.mxu0 %v486
  %920 = vmatprep.subr.bf16.mxu0 %v491
  %921 = vmatpush1.bf16.msra.mxu0 %v490
  %922 = vmatprep.subr.bf16.mxu0 0
  %923 = vmatpush1.bf16.msra.mxu0 0
  %924 = vmatprep.subr.bf16.mxu0 0
  %925 = vmatpush1.bf16.msra.mxu0 0
  %926 = vmatprep.subr.bf16.mxu0 0
  %927 = vmatpush1.bf16.msra.mxu0 0
  %928 = vmatprep.subr.bf16.mxu0 0
  %929 = vmatpush1.bf16.msra.mxu0 0
  %930 = vmatprep.subr.bf16.mxu0 0
  %931 = vmatpush1.bf16.msra.mxu0 0
  %932 = vmatprep.subr.bf16.mxu0 0
  %933 = vmatpush1.bf16.msra.mxu0 0
  %934 = vmatprep.subr.bf16.mxu0 0
  %935 = vmatpush1.bf16.msra.mxu0 0
  %936 = vmatprep.subr.bf16.mxu0 0
  %937 = vmatpush1.bf16.msra.mxu0 0
  %938 = vmatprep.mubr.bf16.mxu0 0
  %939 = vmatmul.mubr.bf16.gmra.mrb[0].mxu0 %v864
  %v940 = vpop.f32.mrb[0].mxu0
  %v941 = vadd.f32 0.0, %v940
  %v942 = vpop.f32.mrb[0].mxu0
  %v943 = vadd.f32 0.0, %v942
  %v944 = vpop.f32.mrb[0].mxu0
  %v945 = vpop.f32.mrb[0].mxu0
  %946 = vdwg.mxu0
  %v947 = vadd.f32 %v860, %v900
  %v948 = vadd.f32 %v861, %v902
  %v949 = vadd.f32 %v862, %v941
  %v950 = vadd.f32 %v863, %v943
  %v951 = vmul.f32 %v947, 0.5
  %v952 = vtanh.pop %v951
  %v953 = vmul.f32 %v952, 0.5
  %v954 = vadd.f32 %v953, 0.5
  %v955 = vmul.f32 %v948, 0.5
  %v956 = vtanh.pop %v955
  %v957 = vmul.f32 %v956, 0.5
  %v958 = vadd.f32 %v957, 0.5
  %v959 = vtanh.pop %v949
  %v960 = vmul.f32 %v950, 0.5
  %v961 = vtanh.pop %v960
  %v962 = vmul.f32 %v961, 0.5
  %v963 = vadd.f32 %v962, 0.5
  %v964 = vmul.f32 %v958, %v852
  %v965 = vmul.f32 %v954, %v959
  %v966 = vadd.f32 %v964, %v965
  %v967 = vtanh.pop %v966
  %v968 = vmul.f32 %v963, %v967
  %s969 = scalar_lea.vmem [#allocation3], 24
  %970 = vst [vmem:[%s969] sm:$0xff] %v968
  %s971 = smul.u32 4, 4
  %s972 = smul.addr %s971, 8
  %s973 = scalar_lea.vmem [#allocation2], %s972
  %v974 = vld [vmem:[%s973] sm:$0xff]
  %v975 = vld [vmem:[%s973 + $0x8] sm:$0xff]
  %v976 = vld [vmem:[%s973 + $0x10] sm:$0xff]
  %v977 = vld [vmem:[%s973 + $0x18] sm:$0xff]
  %v978 = vpack.c.bf16 %v968, %v968
  %979 = vmatprep.subr.bf16.mxu0 %v461
  %980 = vmatpush1.bf16.msra.mxu0 %v460
  %981 = vmatprep.subr.bf16.mxu0 %v465
  %982 = vmatpush1.bf16.msra.mxu0 %v464
  %983 = vmatprep.subr.bf16.mxu0 %v469
  %984 = vmatpush1.bf16.msra.mxu0 %v468
  %985 = vmatprep.subr.bf16.mxu0 %v473
  %986 = vmatpush1.bf16.msra.mxu0 %v472
  %987 = vmatprep.subr.bf16.mxu0 %v477
  %988 = vmatpush1.bf16.msra.mxu0 %v476
  %989 = vmatprep.subr.bf16.mxu0 %v481
  %990 = vmatpush1.bf16.msra.mxu0 %v480
  %991 = vmatprep.subr.bf16.mxu0 %v485
  %992 = vmatpush1.bf16.msra.mxu0 %v484
  %993 = vmatprep.subr.bf16.mxu0 %v489
  %994 = vmatpush1.bf16.msra.mxu0 %v488
  %995 = vmatprep.subr.bf16.mxu0 0
  %996 = vmatpush1.bf16.msra.mxu0 0
  %997 = vmatprep.subr.bf16.mxu0 0
  %998 = vmatpush1.bf16.msra.mxu0 0
  %999 = vmatprep.subr.bf16.mxu0 0
  %1000 = vmatpush1.bf16.msra.mxu0 0
  %1001 = vmatprep.subr.bf16.mxu0 0
  %1002 = vmatpush1.bf16.msra.mxu0 0
  %1003 = vmatprep.subr.bf16.mxu0 0
  %1004 = vmatpush1.bf16.msra.mxu0 0
  %1005 = vmatprep.subr.bf16.mxu0 0
  %1006 = vmatpush1.bf16.msra.mxu0 0
  %1007 = vmatprep.subr.bf16.mxu0 0
  %1008 = vmatpush1.bf16.msra.mxu0 0
  %1009 = vmatprep.subr.bf16.mxu0 0
  %1010 = vmatpush1.bf16.msra.mxu0 0
  %1011 = vmatprep.mubr.bf16.mxu0 0
  %1012 = vmatmul.mubr.bf16.gmra.mrb[0].mxu0 %v978
  %v1013 = vpop.f32.mrb[0].mxu0
  %v1014 = vadd.f32 0.0, %v1013
  %v1015 = vpop.f32.mrb[0].mxu0
  %v1016 = vadd.f32 0.0, %v1015
  %v1017 = vpop.f32.mrb[0].mxu0
  %v1018 = vpop.f32.mrb[0].mxu0
  %1019 = vdwg.mxu0
  %1020 = vmatprep.subr.bf16.mxu0 %v463
  %1021 = vmatpush1.bf16.msra.mxu0 %v462
  %1022 = vmatprep.subr.bf16.mxu0 %v467
  %1023 = vmatpush1.bf16.msra.mxu0 %v466
  %1024 = vmatprep.subr.bf16.mxu0 %v471
  %1025 = vmatpush1.bf16.msra.mxu0 %v470
  %1026 = vmatprep.subr.bf16.mxu0 %v475
  %1027 = vmatpush1.bf16.msra.mxu0 %v474
  %1028 = vmatprep.subr.bf16.mxu0 %v479
  %1029 = vmatpush1.bf16.msra.mxu0 %v478
  %1030 = vmatprep.subr.bf16.mxu0 %v483
  %1031 = vmatpush1.bf16.msra.mxu0 %v482
  %1032 = vmatprep.subr.bf16.mxu0 %v487
  %1033 = vmatpush1.bf16.msra.mxu0 %v486
  %1034 = vmatprep.subr.bf16.mxu0 %v491
  %1035 = vmatpush1.bf16.msra.mxu0 %v490
  %1036 = vmatprep.subr.bf16.mxu0 0
  %1037 = vmatpush1.bf16.msra.mxu0 0
  %1038 = vmatprep.subr.bf16.mxu0 0
  %1039 = vmatpush1.bf16.msra.mxu0 0
  %1040 = vmatprep.subr.bf16.mxu0 0
  %1041 = vmatpush1.bf16.msra.mxu0 0
  %1042 = vmatprep.subr.bf16.mxu0 0
  %1043 = vmatpush1.bf16.msra.mxu0 0
  %1044 = vmatprep.subr.bf16.mxu0 0
  %1045 = vmatpush1.bf16.msra.mxu0 0
  %1046 = vmatprep.subr.bf16.mxu0 0
  %1047 = vmatpush1.bf16.msra.mxu0 0
  %1048 = vmatprep.subr.bf16.mxu0 0
  %1049 = vmatpush1.bf16.msra.mxu0 0
  %1050 = vmatprep.subr.bf16.mxu0 0
  %1051 = vmatpush1.bf16.msra.mxu0 0
  %1052 = vmatprep.mubr.bf16.mxu0 0
  %1053 = vmatmul.mubr.bf16.gmra.mrb[0].mxu0 %v978
  %v1054 = vpop.f32.mrb[0].mxu0
  %v1055 = vadd.f32 0.0, %v1054
  %v1056 = vpop.f32.mrb[0].mxu0
  %v1057 = vadd.f32 0.0, %v1056
  %v1058 = vpop.f32.mrb[0].mxu0
  %v1059 = vpop.f32.mrb[0].mxu0
  %1060 = vdwg.mxu0
  %v1061 = vadd.f32 %v974, %v1014
  %v1062 = vadd.f32 %v975, %v1016
  %v1063 = vadd.f32 %v976, %v1055
  %v1064 = vadd.f32 %v977, %v1057
  %v1065 = vmul.f32 %v1061, 0.5
  %v1066 = vtanh.pop %v1065
  %v1067 = vmul.f32 %v1066, 0.5
  %v1068 = vadd.f32 %v1067, 0.5
  %v1069 = vmul.f32 %v1062, 0.5
  %v1070 = vtanh.pop %v1069
  %v1071 = vmul.f32 %v1070, 0.5
  %v1072 = vadd.f32 %v1071, 0.5
  %v1073 = vtanh.pop %v1063
  %v1074 = vmul.f32 %v1064, 0.5
  %v1075 = vtanh.pop %v1074
  %v1076 = vmul.f32 %v1075, 0.5
  %v1077 = vadd.f32 %v1076, 0.5
  %v1078 = vmul.f32 %v1072, %v966
  %v1079 = vmul.f32 %v1068, %v1073
  %v1080 = vadd.f32 %v1078, %v1079
  %v1081 = vtanh.pop %v1080
  %v1082 = vmul.f32 %v1077, %v1081
  %s1083 = scalar_lea.vmem [#allocation3], 32
  %1084 = vst [vmem:[%s1083] sm:$0xff] %v1082
  %s1085 = smul.u32 5, 4
  %s1086 = smul.addr %s1085, 8
  %s1087 = scalar_lea.vmem [#allocation2], %s1086
  %v1088 = vld [vmem:[%s1087] sm:$0xff]
  %v1089 = vld [vmem:[%s1087 + $0x8] sm:$0xff]
  %v1090 = vld [vmem:[%s1087 + $0x10] sm:$0xff]
  %v1091 = vld [vmem:[%s1087 + $0x18] sm:$0xff]
  %v1092 = vpack.c.bf16 %v1082, %v1082
  %1093 = vmatprep.subr.bf16.mxu0 %v461
  %1094 = vmatpush1.bf16.msra.mxu0 %v460
  %1095 = vmatprep.subr.bf16.mxu0 %v465
  %1096 = vmatpush1.bf16.msra.mxu0 %v464
  %1097 = vmatprep.subr.bf16.mxu0 %v469
  %1098 = vmatpush1.bf16.msra.mxu0 %v468
  %1099 = vmatprep.subr.bf16.mxu0 %v473
  %1100 = vmatpush1.bf16.msra.mxu0 %v472
  %1101 = vmatprep.subr.bf16.mxu0 %v477
  %1102 = vmatpush1.bf16.msra.mxu0 %v476
  %1103 = vmatprep.subr.bf16.mxu0 %v481
  %1104 = vmatpush1.bf16.msra.mxu0 %v480
  %1105 = vmatprep.subr.bf16.mxu0 %v485
  %1106 = vmatpush1.bf16.msra.mxu0 %v484
  %1107 = vmatprep.subr.bf16.mxu0 %v489
  %1108 = vmatpush1.bf16.msra.mxu0 %v488
  %1109 = vmatprep.subr.bf16.mxu0 0
  %1110 = vmatpush1.bf16.msra.mxu0 0
  %1111 = vmatprep.subr.bf16.mxu0 0
  %1112 = vmatpush1.bf16.msra.mxu0 0
  %1113 = vmatprep.subr.bf16.mxu0 0
  %1114 = vmatpush1.bf16.msra.mxu0 0
  %1115 = vmatprep.subr.bf16.mxu0 0
  %1116 = vmatpush1.bf16.msra.mxu0 0
  %1117 = vmatprep.subr.bf16.mxu0 0
  %1118 = vmatpush1.bf16.msra.mxu0 0
  %1119 = vmatprep.subr.bf16.mxu0 0
  %1120 = vmatpush1.bf16.msra.mxu0 0
  %1121 = vmatprep.subr.bf16.mxu0 0
  %1122 = vmatpush1.bf16.msra.mxu0 0
  %1123 = vmatprep.subr.bf16.mxu0 0
  %1124 = vmatpush1.bf16.msra.mxu0 0
  %1125 = vmatprep.mubr.bf16.mxu0 0
  %1126 = vmatmul.mubr.bf16.gmra.mrb[0].mxu0 %v1092
  %v1127 = vpop.f32.mrb[0].mxu0
  %v1128 = vadd.f32 0.0, %v1127
  %v1129 = vpop.f32.mrb[0].mxu0
  %v1130 = vadd.f32 0.0, %v1129
  %v1131 = vpop.f32.mrb[0].mxu0
  %v1132 = vpop.f32.mrb[0].mxu0
  %1133 = vdwg.mxu0
  %1134 = vmatprep.subr.bf16.mxu0 %v463
  %1135 = vmatpush1.bf16.msra.mxu0 %v462
  %1136 = vmatprep.subr.bf16.mxu0 %v467
  %1137 = vmatpush1.bf16.msra.mxu0 %v466
  %1138 = vmatprep.subr.bf16.mxu0 %v471
  %1139 = vmatpush1.bf16.msra.mxu0 %v470
  %1140 = vmatprep.subr.bf16.mxu0 %v475
  %1141 = vmatpush1.bf16.msra.mxu0 %v474
  %1142 = vmatprep.subr.bf16.mxu0 %v479
  %1143 = vmatpush1.bf16.msra.mxu0 %v478
  %1144 = vmatprep.subr.bf16.mxu0 %v483
  %1145 = vmatpush1.bf16.msra.mxu0 %v482
  %1146 = vmatprep.subr.bf16.mxu0 %v487
  %1147 = vmatpush1.bf16.msra.mxu0 %v486
  %1148 = vmatprep.subr.bf16.mxu0 %v491
  %1149 = vmatpush1.bf16.msra.mxu0 %v490
  %1150 = vmatprep.subr.bf16.mxu0 0
  %1151 = vmatpush1.bf16.msra.mxu0 0
  %1152 = vmatprep.subr.bf16.mxu0 0
  %1153 = vmatpush1.bf16.msra.mxu0 0
  %1154 = vmatprep.subr.bf16.mxu0 0
  %1155 = vmatpush1.bf16.msra.mxu0 0
  %1156 = vmatprep.subr.bf16.mxu0 0
  %1157 = vmatpush1.bf16.msra.mxu0 0
  %1158 = vmatprep.subr.bf16.mxu0 0
  %1159 = vmatpush1.bf16.msra.mxu0 0
  %1160 = vmatprep.subr.bf16.mxu0 0
  %1161 = vmatpush1.bf16.msra.mxu0 0
  %1162 = vmatprep.subr.bf16.mxu0 0
  %1163 = vmatpush1.bf16.msra.mxu0 0
  %1164 = vmatprep.subr.bf16.mxu0 0
  %1165 = vmatpush1.bf16.msra.mxu0 0
  %1166 = vmatprep.mubr.bf16.mxu0 0
  %1167 = vmatmul.mubr.bf16.gmra.mrb[0].mxu0 %v1092
  %v1168 = vpop.f32.mrb[0].mxu0
  %v1169 = vadd.f32 0.0, %v1168
  %v1170 = vpop.f32.mrb[0].mxu0
  %v1171 = vadd.f32 0.0, %v1170
  %v1172 = vpop.f32.mrb[0].mxu0
  %v1173 = vpop.f32.mrb[0].mxu0
  %1174 = vdwg.mxu0
  %v1175 = vadd.f32 %v1088, %v1128
  %v1176 = vadd.f32 %v1089, %v1130
  %v1177 = vadd.f32 %v1090, %v1169
  %v1178 = vadd.f32 %v1091, %v1171
  %v1179 = vmul.f32 %v1175, 0.5
  %v1180 = vtanh.pop %v1179
  %v1181 = vmul.f32 %v1180, 0.5
  %v1182 = vadd.f32 %v1181, 0.5
  %v1183 = vmul.f32 %v1176, 0.5
  %v1184 = vtanh.pop %v1183
  %v1185 = vmul.f32 %v1184, 0.5
  %v1186 = vadd.f32 %v1185, 0.5
  %v1187 = vtanh.pop %v1177
  %v1188 = vmul.f32 %v1178, 0.5
  %v1189 = vtanh.pop %v1188
  %v1190 = vmul.f32 %v1189, 0.5
  %v1191 = vadd.f32 %v1190, 0.5
  %v1192 = vmul.f32 %v1186, %v1080
  %v1193 = vmul.f32 %v1182, %v1187
  %v1194 = vadd.f32 %v1192, %v1193
  %v1195 = vtanh.pop %v1194
  %v1196 = vmul.f32 %v1191, %v1195
  %s1197 = scalar_lea.vmem [#allocation3], 40
  %1198 = vst [vmem:[%s1197] sm:$0xff] %v1196
  %s1199 = smul.u32 6, 4
  %s1200 = smul.addr %s1199, 8
  %s1201 = scalar_lea.vmem [#allocation2], %s1200
  %v1202 = vld [vmem:[%s1201] sm:$0xff]
  %v1203 = vld [vmem:[%s1201 + $0x8] sm:$0xff]
  %v1204 = vld [vmem:[%s1201 + $0x10] sm:$0xff]
  %v1205 = vld [vmem:[%s1201 + $0x18] sm:$0xff]
  %v1206 = vpack.c.bf16 %v1196, %v1196
  %1207 = vmatprep.subr.bf16.mxu0 %v461
  %1208 = vmatpush1.bf16.msra.mxu0 %v460
  %1209 = vmatprep.subr.bf16.mxu0 %v465
  %1210 = vmatpush1.bf16.msra.mxu0 %v464
  %1211 = vmatprep.subr.bf16.mxu0 %v469
  %1212 = vmatpush1.bf16.msra.mxu0 %v468
  %1213 = vmatprep.subr.bf16.mxu0 %v473
  %1214 = vmatpush1.bf16.msra.mxu0 %v472
  %1215 = vmatprep.subr.bf16.mxu0 %v477
  %1216 = vmatpush1.bf16.msra.mxu0 %v476
  %1217 = vmatprep.subr.bf16.mxu0 %v481
  %1218 = vmatpush1.bf16.msra.mxu0 %v480
  %1219 = vmatprep.subr.bf16.mxu0 %v485
  %1220 = vmatpush1.bf16.msra.mxu0 %v484
  %1221 = vmatprep.subr.bf16.mxu0 %v489
  %1222 = vmatpush1.bf16.msra.mxu0 %v488
  %1223 = vmatprep.subr.bf16.mxu0 0
  %1224 = vmatpush1.bf16.msra.mxu0 0
  %1225 = vmatprep.subr.bf16.mxu0 0
  %1226 = vmatpush1.bf16.msra.mxu0 0
  %1227 = vmatprep.subr.bf16.mxu0 0
  %1228 = vmatpush1.bf16.msra.mxu0 0
  %1229 = vmatprep.subr.bf16.mxu0 0
  %1230 = vmatpush1.bf16.msra.mxu0 0
  %1231 = vmatprep.subr.bf16.mxu0 0
  %1232 = vmatpush1.bf16.msra.mxu0 0
  %1233 = vmatprep.subr.bf16.mxu0 0
  %1234 = vmatpush1.bf16.msra.mxu0 0
  %1235 = vmatprep.subr.bf16.mxu0 0
  %1236 = vmatpush1.bf16.msra.mxu0 0
  %1237 = vmatprep.subr.bf16.mxu0 0
  %1238 = vmatpush1.bf16.msra.mxu0 0
  %1239 = vmatprep.mubr.bf16.mxu0 0
  %1240 = vmatmul.mubr.bf16.gmra.mrb[0].mxu0 %v1206
  %v1241 = vpop.f32.mrb[0].mxu0
  %v1242 = vadd.f32 0.0, %v1241
  %v1243 = vpop.f32.mrb[0].mxu0
  %v1244 = vadd.f32 0.0, %v1243
  %v1245 = vpop.f32.mrb[0].mxu0
  %v1246 = vpop.f32.mrb[0].mxu0
  %1247 = vdwg.mxu0
  %1248 = vmatprep.subr.bf16.mxu0 %v463
  %1249 = vmatpush1.bf16.msra.mxu0 %v462
  %1250 = vmatprep.subr.bf16.mxu0 %v467
  %1251 = vmatpush1.bf16.msra.mxu0 %v466
  %1252 = vmatprep.subr.bf16.mxu0 %v471
  %1253 = vmatpush1.bf16.msra.mxu0 %v470
  %1254 = vmatprep.subr.bf16.mxu0 %v475
  %1255 = vmatpush1.bf16.msra.mxu0 %v474
  %1256 = vmatprep.subr.bf16.mxu0 %v479
  %1257 = vmatpush1.bf16.msra.mxu0 %v478
  %1258 = vmatprep.subr.bf16.mxu0 %v483
  %1259 = vmatpush1.bf16.msra.mxu0 %v482
  %1260 = vmatprep.subr.bf16.mxu0 %v487
  %1261 = vmatpush1.bf16.msra.mxu0 %v486
  %1262 = vmatprep.subr.bf16.mxu0 %v491
  %1263 = vmatpush1.bf16.msra.mxu0 %v490
  %1264 = vmatprep.subr.bf16.mxu0 0
  %1265 = vmatpush1.bf16.msra.mxu0 0
  %1266 = vmatprep.subr.bf16.mxu0 0
  %1267 = vmatpush1.bf16.msra.mxu0 0
  %1268 = vmatprep.subr.bf16.mxu0 0
  %1269 = vmatpush1.bf16.msra.mxu0 0
  %1270 = vmatprep.subr.bf16.mxu0 0
  %1271 = vmatpush1.bf16.msra.mxu0 0
  %1272 = vmatprep.subr.bf16.mxu0 0
  %1273 = vmatpush1.bf16.msra.mxu0 0
  %1274 = vmatprep.subr.bf16.mxu0 0
  %1275 = vmatpush1.bf16.msra.mxu0 0
  %1276 = vmatprep.subr.bf16.mxu0 0
  %1277 = vmatpush1.bf16.msra.mxu0 0
  %1278 = vmatprep.subr.bf16.mxu0 0
  %1279 = vmatpush1.bf16.msra.mxu0 0
  %1280 = vmatprep.mubr.bf16.mxu0 0
  %1281 = vmatmul.mubr.bf16.gmra.mrb[0].mxu0 %v1206
  %v1282 = vpop.f32.mrb[0].mxu0
  %v1283 = vadd.f32 0.0, %v1282
  %v1284 = vpop.f32.mrb[0].mxu0
  %v1285 = vadd.f32 0.0, %v1284
  %v1286 = vpop.f32.mrb[0].mxu0
  %v1287 = vpop.f32.mrb[0].mxu0
  %1288 = vdwg.mxu0
  %v1289 = vadd.f32 %v1202, %v1242
  %v1290 = vadd.f32 %v1203, %v1244
  %v1291 = vadd.f32 %v1204, %v1283
  %v1292 = vadd.f32 %v1205, %v1285
  %v1293 = vmul.f32 %v1289, 0.5
  %v1294 = vtanh.pop %v1293
  %v1295 = vmul.f32 %v1294, 0.5
  %v1296 = vadd.f32 %v1295, 0.5
  %v1297 = vmul.f32 %v1290, 0.5
  %v1298 = vtanh.pop %v1297
  %v1299 = vmul.f32 %v1298, 0.5
  %v1300 = vadd.f32 %v1299, 0.5
  %v1301 = vtanh.pop %v1291
  %v1302 = vmul.f32 %v1292, 0.5
  %v1303 = vtanh.pop %v1302
  %v1304 = vmul.f32 %v1303, 0.5
  %v1305 = vadd.f32 %v1304, 0.5
  %v1306 = vmul.f32 %v1300, %v1194
  %v1307 = vmul.f32 %v1296, %v1301
  %v1308 = vadd.f32 %v1306, %v1307
  %v1309 = vtanh.pop %v1308
  %v1310 = vmul.f32 %v1305, %v1309
  %s1311 = scalar_lea.vmem [#allocation3], 48
  %1312 = vst [vmem:[%s1311] sm:$0xff] %v1310
  %s1313 = smul.u32 7, 4
  %s1314 = smul.addr %s1313, 8
  %s1315 = scalar_lea.vmem [#allocation2], %s1314
  %v1316 = vld [vmem:[%s1315] sm:$0xff]
  %v1317 = vld [vmem:[%s1315 + $0x8] sm:$0xff]
  %v1318 = vld [vmem:[%s1315 + $0x10] sm:$0xff]
  %v1319 = vld [vmem:[%s1315 + $0x18] sm:$0xff]
  %v1320 = vpack.c.bf16 %v1310, %v1310
  %1321 = vmatprep.subr.bf16.mxu0 %v461
  %1322 = vmatpush1.bf16.msra.mxu0 %v460
  %1323 = vmatprep.subr.bf16.mxu0 %v465
  %1324 = vmatpush1.bf16.msra.mxu0 %v464
  %1325 = vmatprep.subr.bf16.mxu0 %v469
  %1326 = vmatpush1.bf16.msra.mxu0 %v468
  %1327 = vmatprep.subr.bf16.mxu0 %v473
  %1328 = vmatpush1.bf16.msra.mxu0 %v472
  %1329 = vmatprep.subr.bf16.mxu0 %v477
  %1330 = vmatpush1.bf16.msra.mxu0 %v476
  %1331 = vmatprep.subr.bf16.mxu0 %v481
  %1332 = vmatpush1.bf16.msra.mxu0 %v480
  %1333 = vmatprep.subr.bf16.mxu0 %v485
  %1334 = vmatpush1.bf16.msra.mxu0 %v484
  %1335 = vmatprep.subr.bf16.mxu0 %v489
  %1336 = vmatpush1.bf16.msra.mxu0 %v488
  %1337 = vmatprep.subr.bf16.mxu0 0
  %1338 = vmatpush1.bf16.msra.mxu0 0
  %1339 = vmatprep.subr.bf16.mxu0 0
  %1340 = vmatpush1.bf16.msra.mxu0 0
  %1341 = vmatprep.subr.bf16.mxu0 0
  %1342 = vmatpush1.bf16.msra.mxu0 0
  %1343 = vmatprep.subr.bf16.mxu0 0
  %1344 = vmatpush1.bf16.msra.mxu0 0
  %1345 = vmatprep.subr.bf16.mxu0 0
  %1346 = vmatpush1.bf16.msra.mxu0 0
  %1347 = vmatprep.subr.bf16.mxu0 0
  %1348 = vmatpush1.bf16.msra.mxu0 0
  %1349 = vmatprep.subr.bf16.mxu0 0
  %1350 = vmatpush1.bf16.msra.mxu0 0
  %1351 = vmatprep.subr.bf16.mxu0 0
  %1352 = vmatpush1.bf16.msra.mxu0 0
  %1353 = vmatprep.mubr.bf16.mxu0 0
  %1354 = vmatmul.mubr.bf16.gmra.mrb[0].mxu0 %v1320
  %v1355 = vpop.f32.mrb[0].mxu0
  %v1356 = vadd.f32 0.0, %v1355
  %v1357 = vpop.f32.mrb[0].mxu0
  %v1358 = vadd.f32 0.0, %v1357
  %v1359 = vpop.f32.mrb[0].mxu0
  %v1360 = vpop.f32.mrb[0].mxu0
  %1361 = vdwg.mxu0
  %1362 = vmatprep.subr.bf16.mxu0 %v463
  %1363 = vmatpush1.bf16.msra.mxu0 %v462
  %1364 = vmatprep.subr.bf16.mxu0 %v467
  %1365 = vmatpush1.bf16.msra.mxu0 %v466
  %1366 = vmatprep.subr.bf16.mxu0 %v471
  %1367 = vmatpush1.bf16.msra.mxu0 %v470
  %1368 = vmatprep.subr.bf16.mxu0 %v475
  %1369 = vmatpush1.bf16.msra.mxu0 %v474
  %1370 = vmatprep.subr.bf16.mxu0 %v479
  %1371 = vmatpush1.bf16.msra.mxu0 %v478
  %1372 = vmatprep.subr.bf16.mxu0 %v483
  %1373 = vmatpush1.bf16.msra.mxu0 %v482
  %1374 = vmatprep.subr.bf16.mxu0 %v487
  %1375 = vmatpush1.bf16.msra.mxu0 %v486
  %1376 = vmatprep.subr.bf16.mxu0 %v491
  %1377 = vmatpush1.bf16.msra.mxu0 %v490
  %1378 = vmatprep.subr.bf16.mxu0 0
  %1379 = vmatpush1.bf16.msra.mxu0 0
  %1380 = vmatprep.subr.bf16.mxu0 0
  %1381 = vmatpush1.bf16.msra.mxu0 0
  %1382 = vmatprep.subr.bf16.mxu0 0
  %1383 = vmatpush1.bf16.msra.mxu0 0
  %1384 = vmatprep.subr.bf16.mxu0 0
  %1385 = vmatpush1.bf16.msra.mxu0 0
  %1386 = vmatprep.subr.bf16.mxu0 0
  %1387 = vmatpush1.bf16.msra.mxu0 0
  %1388 = vmatprep.subr.bf16.mxu0 0
  %1389 = vmatpush1.bf16.msra.mxu0 0
  %1390 = vmatprep.subr.bf16.mxu0 0
  %1391 = vmatpush1.bf16.msra.mxu0 0
  %1392 = vmatprep.subr.bf16.mxu0 0
  %1393 = vmatpush1.bf16.msra.mxu0 0
  %1394 = vmatprep.mubr.bf16.mxu0 0
  %1395 = vmatmul.mubr.bf16.gmra.mrb[0].mxu0 %v1320
  %v1396 = vpop.f32.mrb[0].mxu0
  %v1397 = vadd.f32 0.0, %v1396
  %v1398 = vpop.f32.mrb[0].mxu0
  %v1399 = vadd.f32 0.0, %v1398
  %v1400 = vpop.f32.mrb[0].mxu0
  %v1401 = vpop.f32.mrb[0].mxu0
  %1402 = vdwg.mxu0
  %v1403 = vadd.f32 %v1316, %v1356
  %v1404 = vadd.f32 %v1317, %v1358
  %v1405 = vadd.f32 %v1318, %v1397
  %v1406 = vadd.f32 %v1319, %v1399
  %v1407 = vmul.f32 %v1403, 0.5
  %v1408 = vtanh.pop %v1407
  %v1409 = vmul.f32 %v1408, 0.5
  %v1410 = vadd.f32 %v1409, 0.5
  %v1411 = vmul.f32 %v1404, 0.5
  %v1412 = vtanh.pop %v1411
  %v1413 = vmul.f32 %v1412, 0.5
  %v1414 = vadd.f32 %v1413, 0.5
  %v1415 = vtanh.pop %v1405
  %v1416 = vmul.f32 %v1406, 0.5
  %v1417 = vtanh.pop %v1416
  %v1418 = vmul.f32 %v1417, 0.5
  %v1419 = vadd.f32 %v1418, 0.5
  %v1420 = vmul.f32 %v1414, %v1308
  %v1421 = vmul.f32 %v1410, %v1415
  %v1422 = vadd.f32 %v1420, %v1421
  %v1423 = vtanh.pop %v1422
  %v1424 = vmul.f32 %v1419, %v1423
  %s1425 = scalar_lea.vmem [#allocation3], 56
  %1426 = vst [vmem:[%s1425] sm:$0xff] %v1424
  %v1427 = vld [vmem:[#allocation3] sm:$0xff]
  %v1428 = vld [vmem:[#allocation3 + $0x8] sm:$0xff]
  %v1429 = vld [vmem:[#allocation3 + $0x10] sm:$0xff]
  %v1430 = vld [vmem:[#allocation3 + $0x18] sm:$0xff]
  %v1431 = vld [vmem:[#allocation3 + $0x20] sm:$0xff]
  %v1432 = vld [vmem:[#allocation3 + $0x28] sm:$0xff]
  %v1433 = vld [vmem:[#allocation3 + $0x30] sm:$0xff]
  %v1434 = vld [vmem:[#allocation3 + $0x38] sm:$0xff]
  %v1435 = vpack.c.bf16 %v1428, %v1427
  %v1436 = vpack.c.bf16 %v1430, %v1429
  %v1437 = vpack.c.bf16 %v1432, %v1431
  %v1438 = vpack.c.bf16 %v1434, %v1433
  %v1439 = vld [vmem:[%s4] sm:$0xf]
  %v1440 = vld [vmem:[%s4 + $0x4] sm:$0xf]
  %v1441 = vld [vmem:[%s4 + $0x8] sm:$0xf]
  %v1442 = vld [vmem:[%s4 + $0xc] sm:$0xf]
  %v1443 = vld [vmem:[%s4 + $0x10] sm:$0xf]
  %v1444 = vld [vmem:[%s4 + $0x14] sm:$0xf]
  %v1445 = vld [vmem:[%s4 + $0x18] sm:$0xf]
  %v1446 = vld [vmem:[%s4 + $0x1c] sm:$0xf]
  %v1447 = vld [vmem:[%s4 + $0x20] sm:$0xf]
  %v1448 = vld [vmem:[%s4 + $0x24] sm:$0xf]
  %v1449 = vld [vmem:[%s4 + $0x28] sm:$0xf]
  %v1450 = vld [vmem:[%s4 + $0x2c] sm:$0xf]
  %v1451 = vld [vmem:[%s4 + $0x30] sm:$0xf]
  %v1452 = vld [vmem:[%s4 + $0x34] sm:$0xf]
  %v1453 = vld [vmem:[%s4 + $0x38] sm:$0xf]
  %v1454 = vld [vmem:[%s4 + $0x3c] sm:$0xf]
  %v1455 = vld [vmem:[%s5] sm:$0x1]
  %v1457 = vlaneseq
  %v1458 = vshrl.u32 %v1457, 7
  %v1459 = vsub.s32 0, %v1458
  %v1460 = vrot.slane %v1455, %v1459
  %v1478 = vunpack.c.l.b16 %v1439
  %v1479 = vunpack.c.l.b16 %v1440
  %v1480 = vunpack.c.l.b16 %v1441
  %v1481 = vunpack.c.l.b16 %v1442
  %v1482 = vunpack.c.l.b16 %v1443
  %v1483 = vunpack.c.l.b16 %v1444
  %v1484 = vunpack.c.l.b16 %v1445
  %v1485 = vunpack.c.l.b16 %v1446
  %v1486 = vunpack.c.l.b16 %v1447
  %v1487 = vunpack.c.l.b16 %v1448
  %v1488 = vunpack.c.l.b16 %v1449
  %v1489 = vunpack.c.l.b16 %v1450
  %v1490 = vunpack.c.l.b16 %v1451
  %v1491 = vunpack.c.l.b16 %v1452
  %v1492 = vunpack.c.l.b16 %v1453
  %v1493 = vunpack.c.l.b16 %v1454
  %v1494 = vpack.c.b16 %v1479, %v1478
  %v1495 = vpack.c.b16 %v1481, %v1480
  %v1496 = vpack.c.b16 %v1483, %v1482
  %v1497 = vpack.c.b16 %v1485, %v1484
  %v1498 = vpack.c.b16 %v1487, %v1486
  %v1499 = vpack.c.b16 %v1489, %v1488
  %v1500 = vpack.c.b16 %v1491, %v1490
  %v1501 = vpack.c.b16 %v1493, %v1492
  %1510 = vmatprep.subr.bf16.mxu0 0
  %1511 = vmatpush1.bf16.msra.mxu0 %v1494
  %1512 = vmatprep.subr.bf16.mxu0 0
  %1513 = vmatpush1.bf16.msra.mxu0 %v1495
  %1514 = vmatprep.subr.bf16.mxu0 0
  %1515 = vmatpush1.bf16.msra.mxu0 %v1496
  %1516 = vmatprep.subr.bf16.mxu0 0
  %1517 = vmatpush1.bf16.msra.mxu0 %v1497
  %1518 = vmatprep.subr.bf16.mxu0 0
  %1519 = vmatpush1.bf16.msra.mxu0 %v1498
  %1520 = vmatprep.subr.bf16.mxu0 0
  %1521 = vmatpush1.bf16.msra.mxu0 %v1499
  %1522 = vmatprep.subr.bf16.mxu0 0
  %1523 = vmatpush1.bf16.msra.mxu0 %v1500
  %1524 = vmatprep.subr.bf16.mxu0 0
  %1525 = vmatpush1.bf16.msra.mxu0 %v1501
  %1526 = vmatprep.subr.bf16.mxu0 0
  %1527 = vmatpush1.bf16.msra.mxu0 0
  %1528 = vmatprep.subr.bf16.mxu0 0
  %1529 = vmatpush1.bf16.msra.mxu0 0
  %1530 = vmatprep.subr.bf16.mxu0 0
  %1531 = vmatpush1.bf16.msra.mxu0 0
  %1532 = vmatprep.subr.bf16.mxu0 0
  %1533 = vmatpush1.bf16.msra.mxu0 0
  %1534 = vmatprep.subr.bf16.mxu0 0
  %1535 = vmatpush1.bf16.msra.mxu0 0
  %1536 = vmatprep.subr.bf16.mxu0 0
  %1537 = vmatpush1.bf16.msra.mxu0 0
  %1538 = vmatprep.subr.bf16.mxu0 0
  %1539 = vmatpush1.bf16.msra.mxu0 0
  %1540 = vmatprep.subr.bf16.mxu0 0
  %1541 = vmatpush1.bf16.msra.mxu0 0
  %1542 = vmatprep.mubr.bf16.mxu0 0
  %1543 = vmatmul.mubr.bf16.gmra.mrb[0].mxu0 %v1435
  %v1544 = vpop.f32.mrb[0].mxu0
  %v1545 = vadd.f32 %v1460, %v1544
  %v1546 = vpop.f32.mrb[0].mxu0
  %v1547 = vpop.f32.mrb[0].mxu0
  %v1548 = vadd.f32 %v1460, %v1547
  %v1549 = vpop.f32.mrb[0].mxu0
  %1550 = vmatprep.mubr.bf16.mxu0 0
  %1551 = vmatmul.mubr.bf16.gmra.mrb[0].mxu0 %v1436
  %v1552 = vpop.f32.mrb[0].mxu0
  %v1553 = vadd.f32 %v1460, %v1552
  %v1554 = vpop.f32.mrb[0].mxu0
  %v1555 = vpop.f32.mrb[0].mxu0
  %v1556 = vadd.f32 %v1460, %v1555
  %v1557 = vpop.f32.mrb[0].mxu0
  %1558 = vmatprep.mubr.bf16.mxu0 0
  %1559 = vmatmul.mubr.bf16.gmra.mrb[0].mxu0 %v1437
  %v1560 = vpop.f32.mrb[0].mxu0
  %v1561 = vadd.f32 %v1460, %v1560
  %v1562 = vpop.f32.mrb[0].mxu0
  %v1563 = vpop.f32.mrb[0].mxu0
  %v1564 = vadd.f32 %v1460, %v1563
  %v1565 = vpop.f32.mrb[0].mxu0
  %1566 = vmatprep.mubr.bf16.mxu0 0
  %1567 = vmatmul.mubr.bf16.gmra.mrb[0].mxu0 %v1438
  %v1568 = vpop.f32.mrb[0].mxu0
  %v1569 = vadd.f32 %v1460, %v1568
  %v1570 = vpop.f32.mrb[0].mxu0
  %v1571 = vpop.f32.mrb[0].mxu0
  %v1572 = vadd.f32 %v1460, %v1571
  %v1573 = vpop.f32.mrb[0].mxu0
  %1574 = vdwg.mxu0
  %1575 = vst [vmem:[%s6] sm:$0xff] %v1545
  %1576 = vst [vmem:[%s6 + $0x8] sm:$0xff] %v1548
  %1577 = vst [vmem:[%s6 + $0x10] sm:$0xff] %v1553
  %1578 = vst [vmem:[%s6 + $0x18] sm:$0xff] %v1556
  %1579 = vst [vmem:[%s6 + $0x20] sm:$0xff] %v1561
  %1580 = vst [vmem:[%s6 + $0x28] sm:$0xff] %v1564
  %1581 = vst [vmem:[%s6 + $0x30] sm:$0xff] %v1569
  %1582 = vst [vmem:[%s6 + $0x38] sm:$0xff] %v1572
  // Predicated region
  $region26: #{name_lstm_forward.1} parent=0 // pred_check
    _
  $region27: #{name_lstm_forward.1} parent=0 // pred_check_branch
    %1584 = sbr.rel (0) target = $region29
  $region28: #{name_lstm_forward.1} parent=0 // pred_region
    _
  $region29: #{name_lstm_forward.1} parent=0 // pred_fallthru
    _
  // Predicated region
  $region30: #{name_lstm_forward.1} parent=0 // pred_check
    _
  $region31: #{name_lstm_forward.1} parent=0 // pred_check_branch
    %1586 = sbr.rel (0) target = $region33
  $region32: #{name_lstm_forward.1} parent=0 // pred_region
    _
  $region33: #{name_lstm_forward.1} parent=0 // pred_fallthru
    _

</llo_original>
